<compile_context>
chip_gen: v6e
topology: v6e:2x2x1
jax: 0.10.0
libtpu: 0.0.40
codegen_flags: <defaults>
</compile_context>

<pallas_src>
import math
from functools import partial

import jax
import jax.numpy as jnp
from jax.experimental import pallas as pl
from jax.experimental.pallas import tpu as pltpu

EPS = 1e-6          # torchvision ViT uses LayerNorm(eps=1e-6)
EXACT_GELU = False  # False -> tanh GELU (EUP slot); True -> rational-erf GELU


# ---------------------------------------------------------------------------
# in-kernel helpers (f32 elementwise math)
# ---------------------------------------------------------------------------
def _erf(x):
    # Abramowitz & Stegun 7.1.26 rational approximation (max abs err ~1.5e-7).
    a1, a2, a3, a4, a5 = 0.254829592, -0.284496736, 1.421413741, -1.453152027, 1.061405429
    p = 0.3275911
    sgn = jnp.where(x >= 0.0, 1.0, -1.0)
    ax = jnp.abs(x)
    t = 1.0 / (1.0 + p * ax)
    poly = ((((a5 * t + a4) * t + a3) * t + a2) * t + a1) * t
    return sgn * (1.0 - poly * jnp.exp(-ax * ax))


def _gelu(x):
    if EXACT_GELU:
        return 0.5 * x * (1.0 + _erf(x * (1.0 / math.sqrt(2.0))))
    # tanh form: ~4 VPU ops + 1 EUP op (free slot on v6e/v7x), |delta| ~1e-3
    c = math.sqrt(2.0 / math.pi)
    return 0.5 * x * (1.0 + jnp.tanh(c * (x + 0.044715 * x * x * x)))


def _layernorm(x, g, b):
    mu = jnp.mean(x, axis=-1, keepdims=True)
    xc = x - mu
    var = jnp.mean(xc * xc, axis=-1, keepdims=True)
    return xc * jax.lax.rsqrt(var + EPS) * g + b


# ---------------------------------------------------------------------------
# kernels
# ---------------------------------------------------------------------------
def _patch_embed_kernel(p_ref, w_ref, add_ref, o_ref):
    # Rows of p per image: [class-token slot (zeros), patches, seq padding (zeros)]
    # add rows:            [cls_tok + pos[0],  conv_b + pos[1:],  zeros]
    # => Conv2d(k=ps, stride=ps) + class-token concat + pos-embedding add, fused.
    o_ref[0] = jnp.dot(p_ref[0], w_ref[...],
                       preferred_element_type=jnp.float32) + add_ref[...]


def _encoder_layer_kernel(x_ref, g1_ref, b1_ref, wqkv_ref, bqkv_ref,
                          wo_ref, bo_ref, g2_ref, b2_ref,
                          w1_ref, bb1_ref, w2_ref, bb2_ref,
                          o_ref, *, num_heads, seq_real):
    f32, bf16 = jnp.float32, jnp.bfloat16
    x = x_ref[0]                                   # (S, D) f32 — one batch row / step
    S, D = x.shape
    H = num_heads
    hd = D // H

    # ---- LN1 + fused QKV projection (bf16 MXU inputs, f32 accumulation) ----
    h = _layernorm(x, g1_ref[...], b1_ref[...])
    qkv = jnp.dot(h.astype(bf16), wqkv_ref[...],
                  preferred_element_type=f32) + bqkv_ref[...]          # (S, 3D) f32
    qkv = qkv.astype(bf16)

    def heads(lo):
        # lane-aligned D-wide column slice -> (H, S, hd) head-major (one relayout)
        return pltpu.einshape("shd->hsd", qkv[:, lo:lo + D].reshape(S, H, hd))

    q3, k3, v3 = heads(0), heads(D), heads(2 * D)   # 1/sqrt(hd) already in Wq/bq

    # ---- batched attention (heads = leading batch dim) ----
    s = jnp.einsum('hqd,hkd->hqk', q3, k3, preferred_element_type=f32)  # (H,S,S)
    if seq_real < S:                                # static branch: mask padded keys
        kid = jax.lax.broadcasted_iota(jnp.int32, (1, 1, S), 2)
        s = jnp.where(kid < seq_real, s, jnp.float32(-1e30))
    s = s - jnp.max(s, axis=-1, keepdims=True)
    e = jnp.exp(s)
    p = (e * pl.reciprocal(jnp.sum(e, axis=-1, keepdims=True), approx=True)).astype(bf16)
    o = jnp.einsum('hqk,hkd->hqd', p, v3, preferred_element_type=f32)   # (H,S,hd)

    # single full-K output projection against the original Wo (D, D)
    o = pltpu.einshape("hsd->shd", o).reshape(S, D)
    att = jnp.dot(o.astype(bf16), wo_ref[...],
                  preferred_element_type=f32) + bo_ref[...]
    x = x + att                                                         # residual 1

    # ---- LN2 + MLP (Linear -> GELU -> Linear) ----
    y = _layernorm(x, g2_ref[...], b2_ref[...])
    y = jnp.dot(y.astype(bf16), w1_ref[...], preferred_element_type=f32) + bb1_ref[...]
    y = _gelu(y)
    y = jnp.dot(y.astype(bf16), w2_ref[...], preferred_element_type=f32) + bb2_ref[...]
    out = x + y                                                         # residual 2
    if seq_real < S:                                # keep padded rows exactly zero
        rid = jax.lax.broadcasted_iota(jnp.int32, (S, 1), 0)
        out = jnp.where(rid < seq_real, out, 0.0)
    o_ref[0] = out


def _layernorm_kernel(x_ref, g_ref, b_ref, o_ref):
    o_ref[...] = _layernorm(x_ref[...], g_ref[...], b_ref[...])


# ---------------------------------------------------------------------------
# spec / compiler-param helpers
# ---------------------------------------------------------------------------
def _const_spec(shape, index_map):
    """Constant-index (weight) block: its DMA is issued once per pallas_call, so
    a single buffer suffices — halves the weight VMEM footprint."""
    try:
        return pl.BlockSpec(shape, index_map, pipeline_mode=pl.Buffered(1))
    except (TypeError, AttributeError):
        return pl.BlockSpec(shape, index_map)


def _vmem_cap_bytes():
    try:
        return int(pltpu.get_tpu_info().vmem_capacity_bytes)
    except Exception:
        return 64 << 20                 # conservative (v7x-sized) fallback


def _mosaic_params(est_bytes, semantics):
    kwargs = dict(dimension_semantics=semantics)
    # Only raise the scoped-VMEM limit when a large config needs it, and never
    # request more than ~85% of this generation's physical VMEM.
    if est_bytes > (16 << 20):
        ceiling = int(_vmem_cap_bytes() * 0.85)
        kwargs["vmem_limit_bytes"] = int(min(est_bytes * 1.25, ceiling))
    return pltpu.CompilerParams(**kwargs)


def _pad_seq(s):
    if s <= 128:
        return max(8, ((s + 7) // 8) * 8)
    return ((s + 127) // 128) * 128


# ---------------------------------------------------------------------------
# pallas_call wrappers
# ---------------------------------------------------------------------------
def patch_embed_seq(p_pad_bf16, w_t, addrow):
    """(N, S_pad, CK) patches -> (N, S_pad, D) token sequence (cls + pos fused)."""
    N, S, CK = p_pad_bf16.shape
    D = w_t.shape[1]
    est = 2 * (2 * S * CK) + 2 * CK * D + 4 * S * D + 2 * (2 * 4 * S * D) + (1 << 20)
    return pl.pallas_call(
        _patch_embed_kernel,
        out_shape=jax.ShapeDtypeStruct((N, S, D), jnp.float32),
        grid=(N,),
        in_specs=[pl.BlockSpec((1, S, CK), lambda n: (n, 0, 0)),
                  _const_spec((CK, D), lambda n: (0, 0)),
                  _const_spec((S, D), lambda n: (0, 0))],
        out_specs=pl.BlockSpec((1, S, D), lambda n: (n, 0, 0)),
        compiler_params=_mosaic_params(est, ("parallel",)),
    )(p_pad_bf16, w_t, addrow)


def encoder_layer(x, lp, num_heads, seq_real):
    N, S, D = x.shape
    M = lp["w1_t"].shape[1]
    H = num_heads

    def const(shape):
        return _const_spec(shape, lambda n: (0, 0))

    in_specs = [
        pl.BlockSpec((1, S, D), lambda n: (n, 0, 0)),     # x: one batch row / step
        const((1, D)), const((1, D)),                     # ln1 gamma / beta
        const((D, 3 * D)), const((1, 3 * D)),             # fused QKV (bf16 W / f32 b)
        const((D, D)), const((1, D)),                     # out_proj / bias
        const((1, D)), const((1, D)),                     # ln2 gamma / beta
        const((D, M)), const((1, M)),                     # mlp fc1
        const((M, D)), const((1, D)),                     # mlp fc2
    ]

    # VMEM footprint: single-buffered bf16 weights + f32 params + one batch row
    # of intermediates + double-buffered x in/out blocks.
    wbytes = 2 * (3 * D * D + D * D + 2 * D * M)
    pbytes = 4 * (6 * D + 3 * D + M)
    abytes = 4 * (3 * S * D + 3 * S * D + 2 * H * S * S + S * M) \
             + 2 * (3 * S * D + H * S * S + S * M + S * D)
    iobytes = 2 * 2 * 4 * S * D
    est = wbytes + pbytes + abytes + iobytes + (2 << 20)

    return pl.pallas_call(
        partial(_encoder_layer_kernel, num_heads=num_heads, seq_real=seq_real),
        out_shape=jax.ShapeDtypeStruct((N, S, D), jnp.float32),
        grid=(N,),
        in_specs=in_specs,
        out_specs=pl.BlockSpec((1, S, D), lambda n: (n, 0, 0)),
        compiler_params=_mosaic_params(est, ("parallel",)),
    )(x, lp["ln1_g"], lp["ln1_b"], lp["w_qkv_t"], lp["b_qkv"],
      lp["w_out_t"], lp["b_out"], lp["ln2_g"], lp["ln2_b"],
      lp["w1_t"], lp["b1"], lp["w2_t"], lp["b2"])


def layernorm_rows(x2d, g, b):
    R, D = x2d.shape
    TR = R if R <= 512 else 512
    return pl.pallas_call(
        _layernorm_kernel,
        out_shape=jax.ShapeDtypeStruct((R, D), jnp.float32),
        grid=(pl.cdiv(R, TR),),
        in_specs=[pl.BlockSpec((TR, D), lambda i: (i, 0)),
                  _const_spec((1, D), lambda i: (0, 0)),
                  _const_spec((1, D), lambda i: (0, 0))],
        out_specs=pl.BlockSpec((TR, D), lambda i: (i, 0)),
        compiler_params=pltpu.CompilerParams(dimension_semantics=("parallel",)),
    )(x2d, g, b)


# ---------------------------------------------------------------------------
# parameters & forward
# ---------------------------------------------------------------------------
def init_vit_params(key, *, channels, patch, hidden, mlp, layers, heads, seq):
    D, M, CK = hidden, mlp, channels * patch * patch
    hd = D // heads
    scale = 1.0 / math.sqrt(hd)
    bf16 = jnp.bfloat16
    keys = iter(jax.random.split(key, 4 + 6 * layers))

    def nrm(k, shape, std=0.02):
        return std * jax.random.normal(k, shape, jnp.float32)

    conv_w = nrm(next(keys), (D, channels, patch, patch))    # torch conv layout
    params = {
        "conv_w_t": conv_w.reshape(D, CK).T.astype(bf16),    # (C*ps*ps, D) bf16
        "conv_b": jnp.zeros((1, D), jnp.float32),
        "class_token": jnp.zeros((1, 1, D), jnp.float32),    # torchvision init: zeros
        "pos_embedding": nrm(next(keys), (1, seq, D)),       # torchvision init: N(0,0.02)
        "ln_g": jnp.ones((1, D), jnp.float32),
        "ln_b": jnp.zeros((1, D), jnp.float32),
        "layers": [],
    }
    # fold 1/sqrt(hd) into the Q columns of the fused QKV projection (+ Q bias)
    q_scale = jnp.concatenate([jnp.full((D,), scale, jnp.float32),
                               jnp.ones((2 * D,), jnp.float32)])
    for _ in range(layers):
        w_qkv = nrm(next(keys), (3 * D, D))                  # torch (out, in)
        w_out = nrm(next(keys), (D, D))
        w1 = nrm(next(keys), (M, D))
        w2 = nrm(next(keys), (D, M))
        params["layers"].append({
            "ln1_g": jnp.ones((1, D), jnp.float32), "ln1_b": jnp.zeros((1, D), jnp.float32),
            "w_qkv_t": (w_qkv.T * q_scale[None, :]).astype(bf16),
            "b_qkv": (jnp.zeros((3 * D,), jnp.float32) * q_scale)[None, :],
            "w_out_t": w_out.T.astype(bf16), "b_out": jnp.zeros((1, D), jnp.float32),
            "ln2_g": jnp.ones((1, D), jnp.float32), "ln2_b": jnp.zeros((1, D), jnp.float32),
            "w1_t": w1.T.astype(bf16), "b1": jnp.zeros((1, M), jnp.float32),
            "w2_t": w2.T.astype(bf16), "b2": jnp.zeros((1, D), jnp.float32),
        })
    return params


def vit_forward(x, params, *, patch, heads):
    """Equivalent of ViT.forward: returns the encoded class-token feature (N, D)."""
    N, C, Himg, Wimg = x.shape
    nh, nw = Himg // patch, Wimg // patch
    NP = nh * nw
    D = params["conv_w_t"].shape[1]
    S_real = NP + 1
    S_pad = _pad_seq(S_real)

    # _process_input: Conv2d(k=ps, stride=ps) == patchify (host glue) + matmul
    # (Pallas).  Flatten order (C, kh, kw) matches the conv-weight flatten.
    # Row layout per image: [class-token slot, patches, seq padding].
    p = x.reshape(N, C, nh, patch, nw, patch)
    p = p.transpose(0, 2, 4, 1, 3, 5).reshape(N, NP, C * patch * patch)
    p = jnp.pad(p, ((0, 0), (1, S_pad - S_real), (0, 0))).astype(jnp.bfloat16)

    # per-row additive term folds conv bias, class token and positional embedding
    pos = params["pos_embedding"][0]                             # (S_real, D)
    addrow = jnp.concatenate(
        [params["class_token"][0] + pos[:1],                     # row 0: cls + pos0
         params["conv_b"] + pos[1:],                             # patch rows
         jnp.zeros((S_pad - S_real, D), jnp.float32)], axis=0)   # padding rows

    xseq = patch_embed_seq(p, params["conv_w_t"], addrow)        # (N, S_pad, D)

    for lp in params["layers"]:
        xseq = encoder_layer(xseq, lp, heads, S_real)

    # final encoder LayerNorm is per-token and forward() only returns token 0,
    # so normalize just the class-token row (bit-identical, S x less work).
    return layernorm_rows(xseq[:, 0, :], params["ln_g"], params["ln_b"])


# ---------------------------------------------------------------------------
if __name__ == "__main__":
    # small ViT config consistent with the module's structure (patchify conv,
    # class token, pos emb, L encoder blocks, final LN, return x[:, 0])
    cfg = dict(channels=3, patch=8, hidden=128, mlp=256, layers=2, heads=4)
    N, HW = 2, 16
    seq = 1 + (HW // cfg["patch"]) ** 2

    key = jax.random.PRNGKey(0)
    k_params, k_x = jax.random.split(key)
    params = init_vit_params(
        k_params,
        channels=cfg["channels"], patch=cfg["patch"], hidden=cfg["hidden"],
        mlp=cfg["mlp"], layers=cfg["layers"], heads=cfg["heads"], seq=seq,
    )
    x = jax.random.normal(k_x, (N, cfg["channels"], HW, HW), jnp.float32)

    fwd = jax.jit(partial(vit_forward, patch=cfg["patch"], heads=cfg["heads"]))
    out = fwd(x, params)
    jax.block_until_ready(out)
    assert out.shape == (N, cfg["hidden"]) and out.dtype == jnp.float32
    assert bool(jnp.all(jnp.isfinite(out)))
    print("KERNEL_OK")
</pallas_src>

<mosaic_0001>
module attributes {stable_mosaic.version = 11 : i64} {
  func.func @_layernorm_kernel(%arg0: i32, %arg1: memref<2x128xf32, #tpu.memory_space<vmem>>, %arg2: memref<1x128xf32, #tpu.memory_space<vmem>>, %arg3: memref<1x128xf32, #tpu.memory_space<vmem>>, %arg4: memref<2x128xf32, #tpu.memory_space<vmem>>) attributes {dimension_semantics = [#tpu.dimension_semantics<parallel>], iteration_bounds = array<i64: 1>, scalar_prefetch = 0 : i64, scratch_operands = 0 : i64, tpu.core_type = #tpu.core_type<tc>, window_params = [{transform_indices = @transform_0, window_bounds = array<i64: 2, 128>}, {pipeline_mode = #tpu.pipeline_mode<synchronous>, transform_indices = @transform_1, window_bounds = array<i64: 1, 128>}, {pipeline_mode = #tpu.pipeline_mode<synchronous>, transform_indices = @transform_2, window_bounds = array<i64: 1, 128>}, {transform_indices = @transform_3, window_bounds = array<i64: 2, 128>}]} {
    %c0 = arith.constant 0 : index
    %c0_0 = arith.constant 0 : index
    %0 = vector.load %arg1[%c0, %c0_0] : memref<2x128xf32, #tpu.memory_space<vmem>>, vector<2x128xf32>
    %c0_1 = arith.constant 0 : index
    %c0_2 = arith.constant 0 : index
    %1 = vector.load %arg2[%c0_1, %c0_2] : memref<1x128xf32, #tpu.memory_space<vmem>>, vector<1x128xf32>
    %c0_3 = arith.constant 0 : index
    %c0_4 = arith.constant 0 : index
    %2 = vector.load %arg3[%c0_3, %c0_4] : memref<1x128xf32, #tpu.memory_space<vmem>>, vector<1x128xf32>
    %cst = arith.constant dense<0.000000e+00> : vector<2xf32>
    %3 = vector.multi_reduction <add>, %0, %cst [1] : vector<2x128xf32> to vector<2xf32>
    %4 = vector.shape_cast %3 : vector<2xf32> to vector<2x1xf32>
    %cst_5 = arith.constant 1.280000e+02 : f32
    %5 = vector.broadcast %cst_5 : f32 to vector<2x1xf32>
    %6 = arith.divf %4, %5 : vector<2x1xf32>
    %7 = vector.broadcast %6 : vector<2x1xf32> to vector<2x128xf32>
    %8 = arith.subf %0, %7 : vector<2x128xf32>
    %9 = arith.mulf %8, %8 : vector<2x128xf32>
    %cst_6 = arith.constant dense<0.000000e+00> : vector<2xf32>
    %10 = vector.multi_reduction <add>, %9, %cst_6 [1] : vector<2x128xf32> to vector<2xf32>
    %11 = vector.shape_cast %10 : vector<2xf32> to vector<2x1xf32>
    %cst_7 = arith.constant 1.280000e+02 : f32
    %12 = vector.broadcast %cst_7 : f32 to vector<2x1xf32>
    %13 = arith.divf %11, %12 : vector<2x1xf32>
    %cst_8 = arith.constant 9.99999997E-7 : f32
    %14 = vector.broadcast %cst_8 : f32 to vector<2x1xf32>
    %15 = arith.addf %13, %14 : vector<2x1xf32>
    %16 = math.rsqrt %15 : vector<2x1xf32>
    %17 = vector.broadcast %16 : vector<2x1xf32> to vector<2x128xf32>
    %18 = arith.mulf %8, %17 : vector<2x128xf32>
    %19 = vector.broadcast %1 : vector<1x128xf32> to vector<2x128xf32>
    %20 = arith.mulf %18, %19 : vector<2x128xf32>
    %21 = vector.broadcast %2 : vector<1x128xf32> to vector<2x128xf32>
    %22 = arith.addf %20, %21 : vector<2x128xf32>
    %c0_9 = arith.constant 0 : index
    %c0_10 = arith.constant 0 : index
    %23 = vector.load %arg4[%c0_9, %c0_10] : memref<2x128xf32, #tpu.memory_space<vmem>>, vector<2x128xf32>
    tpu.vector_store %arg4[%c0_9, %c0_10], %22 {strides = array<i32>} : memref<2x128xf32, #tpu.memory_space<vmem>>, vector<2x128xf32>,
    return
  }
  func.func @transform_0(%arg0: i32) -> (i32, i32) {
    %c0_i32 = arith.constant 0 : i32
    %c0_i32_0 = arith.constant 0 : i32
    return %arg0, %c0_i32 : i32, i32
  }
  func.func @transform_1(%arg0: i32) -> (i32, i32) {
    %c0_i32 = arith.constant 0 : i32
    %c0_i32_0 = arith.constant 0 : i32
    %c0_i32_1 = arith.constant 0 : i32
    return %c0_i32, %c0_i32_0 : i32, i32
  }
  func.func @transform_2(%arg0: i32) -> (i32, i32) {
    %c0_i32 = arith.constant 0 : i32
    %c0_i32_0 = arith.constant 0 : i32
    %c0_i32_1 = arith.constant 0 : i32
    return %c0_i32, %c0_i32_0 : i32, i32
  }
  func.func @transform_3(%arg0: i32) -> (i32, i32) {
    %c0_i32 = arith.constant 0 : i32
    %c0_i32_0 = arith.constant 0 : i32
    return %arg0, %c0_i32 : i32, i32
  }
}

module attributes {stable_mosaic.version = 11 : i64} {
  func.func @_patch_embed_kernel(%arg0: i32, %arg1: memref<1x8x192xbf16, #tpu.memory_space<vmem>>, %arg2: memref<192x128xbf16, #tpu.memory_space<vmem>>, %arg3: memref<8x128xf32, #tpu.memory_space<vmem>>, %arg4: memref<1x8x128xf32, #tpu.memory_space<vmem>>) attributes {dimension_semantics = [#tpu.dimension_semantics<parallel>], iteration_bounds = array<i64: 2>, scalar_prefetch = 0 : i64, scratch_operands = 0 : i64, tpu.core_type = #tpu.core_type<tc>, window_params = [{transform_indices = @transform_0, window_bounds = array<i64: 1, 8, 192>}, {pipeline_mode = #tpu.pipeline_mode<synchronous>, transform_indices = @transform_1, window_bounds = array<i64: 192, 128>}, {pipeline_mode = #tpu.pipeline_mode<synchronous>, transform_indices = @transform_2, window_bounds = array<i64: 8, 128>}, {transform_indices = @transform_3, window_bounds = array<i64: 1, 8, 128>}]} {
    %c0 = arith.constant 0 : index
    %c0_0 = arith.constant 0 : index
    %c0_1 = arith.constant 0 : index
    %0 = vector.load %arg1[%c0, %c0_0, %c0_1] : memref<1x8x192xbf16, #tpu.memory_space<vmem>>, vector<1x8x192xbf16>
    %1 = vector.shape_cast %0 : vector<1x8x192xbf16> to vector<8x192xbf16>
    %c0_2 = arith.constant 0 : index
    %c0_3 = arith.constant 0 : index
    %2 = vector.load %arg2[%c0_2, %c0_3] : memref<192x128xbf16, #tpu.memory_space<vmem>>, vector<192x128xbf16>
    %cst = arith.constant dense<0.000000e+00> : vector<8x128xf32>
    %3 = tpu.matmul %1, %2, %cst {dimension_numbers = #tpu.dot_dimension_numbers<[1], [0], [0], [1], [0, 0, 1, 1], [], []>} : vector<8x192xbf16>, vector<192x128xbf16>, vector<8x128xf32> -> vector<8x128xf32>
    %c0_4 = arith.constant 0 : index
    %c0_5 = arith.constant 0 : index
    %4 = vector.load %arg3[%c0_4, %c0_5] : memref<8x128xf32, #tpu.memory_space<vmem>>, vector<8x128xf32>
    %5 = arith.addf %3, %4 : vector<8x128xf32>
    %c0_6 = arith.constant 0 : index
    %c0_7 = arith.constant 0 : index
    %c0_8 = arith.constant 0 : index
    %6 = vector.load %arg4[%c0_6, %c0_7, %c0_8] : memref<1x8x128xf32, #tpu.memory_space<vmem>>, vector<1x8x128xf32>
    %7 = vector.shape_cast %6 : vector<1x8x128xf32> to vector<8x128xf32>
    %8 = vector.shape_cast %5 : vector<8x128xf32> to vector<1x8x128xf32>
    tpu.vector_store %arg4[%c0_6, %c0_7, %c0_8], %8 {strides = array<i32>} : memref<1x8x128xf32, #tpu.memory_space<vmem>>, vector<1x8x128xf32>,
    return
  }
  func.func @transform_0(%arg0: i32) -> (i32, i32, i32) {
    %c0_i32 = arith.constant 0 : i32
    %c0_i32_0 = arith.constant 0 : i32
    %c0_i32_1 = arith.constant 0 : i32
    return %arg0, %c0_i32, %c0_i32_0 : i32, i32, i32
  }
  func.func @transform_1(%arg0: i32) -> (i32, i32) {
    %c0_i32 = arith.constant 0 : i32
    %c0_i32_0 = arith.constant 0 : i32
    %c0_i32_1 = arith.constant 0 : i32
    return %c0_i32, %c0_i32_0 : i32, i32
  }
  func.func @transform_2(%arg0: i32) -> (i32, i32) {
    %c0_i32 = arith.constant 0 : i32
    %c0_i32_0 = arith.constant 0 : i32
    %c0_i32_1 = arith.constant 0 : i32
    return %c0_i32, %c0_i32_0 : i32, i32
  }
  func.func @transform_3(%arg0: i32) -> (i32, i32, i32) {
    %c0_i32 = arith.constant 0 : i32
    %c0_i32_0 = arith.constant 0 : i32
    %c0_i32_1 = arith.constant 0 : i32
    return %arg0, %c0_i32, %c0_i32_0 : i32, i32, i32
  }
}

module attributes {stable_mosaic.version = 11 : i64} {
  func.func @_encoder_layer_kernel(%arg0: i32, %arg1: memref<1x8x128xf32, #tpu.memory_space<vmem>>, %arg2: memref<1x128xf32, #tpu.memory_space<vmem>>, %arg3: memref<1x128xf32, #tpu.memory_space<vmem>>, %arg4: memref<128x384xbf16, #tpu.memory_space<vmem>>, %arg5: memref<1x384xf32, #tpu.memory_space<vmem>>, %arg6: memref<128x128xbf16, #tpu.memory_space<vmem>>, %arg7: memref<1x128xf32, #tpu.memory_space<vmem>>, %arg8: memref<1x128xf32, #tpu.memory_space<vmem>>, %arg9: memref<1x128xf32, #tpu.memory_space<vmem>>, %arg10: memref<128x256xbf16, #tpu.memory_space<vmem>>, %arg11: memref<1x256xf32, #tpu.memory_space<vmem>>, %arg12: memref<256x128xbf16, #tpu.memory_space<vmem>>, %arg13: memref<1x128xf32, #tpu.memory_space<vmem>>, %arg14: memref<1x8x128xf32, #tpu.memory_space<vmem>>) attributes {dimension_semantics = [#tpu.dimension_semantics<parallel>], iteration_bounds = array<i64: 2>, scalar_prefetch = 0 : i64, scratch_operands = 0 : i64, tpu.core_type = #tpu.core_type<tc>, window_params = [{transform_indices = @transform_0, window_bounds = array<i64: 1, 8, 128>}, {pipeline_mode = #tpu.pipeline_mode<synchronous>, transform_indices = @transform_1, window_bounds = array<i64: 1, 128>}, {pipeline_mode = #tpu.pipeline_mode<synchronous>, transform_indices = @transform_2, window_bounds = array<i64: 1, 128>}, {pipeline_mode = #tpu.pipeline_mode<synchronous>, transform_indices = @transform_3, window_bounds = array<i64: 128, 384>}, {pipeline_mode = #tpu.pipeline_mode<synchronous>, transform_indices = @transform_4, window_bounds = array<i64: 1, 384>}, {pipeline_mode = #tpu.pipeline_mode<synchronous>, transform_indices = @transform_5, window_bounds = array<i64: 128, 128>}, {pipeline_mode = #tpu.pipeline_mode<synchronous>, transform_indices = @transform_6, window_bounds = array<i64: 1, 128>}, {pipeline_mode = #tpu.pipeline_mode<synchronous>, transform_indices = @transform_7, window_bounds = array<i64: 1, 128>}, {pipeline_mode = #tpu.pipeline_mode<synchronous>, transform_indices = @transform_8, window_bounds = array<i64: 1, 128>}, {pipeline_mode = #tpu.pipeline_mode<synchronous>, transform_indices = @transform_9, window_bounds = array<i64: 128, 256>}, {pipeline_mode = #tpu.pipeline_mode<synchronous>, transform_indices = @transform_10, window_bounds = array<i64: 1, 256>}, {pipeline_mode = #tpu.pipeline_mode<synchronous>, transform_indices = @transform_11, window_bounds = array<i64: 256, 128>}, {pipeline_mode = #tpu.pipeline_mode<synchronous>, transform_indices = @transform_12, window_bounds = array<i64: 1, 128>}, {transform_indices = @transform_13, window_bounds = array<i64: 1, 8, 128>}]} {
    %c0 = arith.constant 0 : index
    %c0_0 = arith.constant 0 : index
    %c0_1 = arith.constant 0 : index
    %0 = vector.load %arg1[%c0, %c0_0, %c0_1] : memref<1x8x128xf32, #tpu.memory_space<vmem>>, vector<1x8x128xf32>
    %1 = vector.shape_cast %0 : vector<1x8x128xf32> to vector<8x128xf32>
    %c0_2 = arith.constant 0 : index
    %c0_3 = arith.constant 0 : index
    %2 = vector.load %arg2[%c0_2, %c0_3] : memref<1x128xf32, #tpu.memory_space<vmem>>, vector<1x128xf32>
    %c0_4 = arith.constant 0 : index
    %c0_5 = arith.constant 0 : index
    %3 = vector.load %arg3[%c0_4, %c0_5] : memref<1x128xf32, #tpu.memory_space<vmem>>, vector<1x128xf32>
    %cst = arith.constant dense<0.000000e+00> : vector<8xf32>
    %4 = vector.multi_reduction <add>, %1, %cst [1] : vector<8x128xf32> to vector<8xf32>
    %5 = vector.shape_cast %4 : vector<8xf32> to vector<8x1xf32>
    %cst_6 = arith.constant 1.280000e+02 : f32
    %6 = vector.broadcast %cst_6 : f32 to vector<8x1xf32>
    %7 = arith.divf %5, %6 : vector<8x1xf32>
    %8 = vector.broadcast %7 : vector<8x1xf32> to vector<8x128xf32>
    %9 = arith.subf %1, %8 : vector<8x128xf32>
    %10 = arith.mulf %9, %9 : vector<8x128xf32>
    %cst_7 = arith.constant dense<0.000000e+00> : vector<8xf32>
    %11 = vector.multi_reduction <add>, %10, %cst_7 [1] : vector<8x128xf32> to vector<8xf32>
    %12 = vector.shape_cast %11 : vector<8xf32> to vector<8x1xf32>
    %cst_8 = arith.constant 1.280000e+02 : f32
    %13 = vector.broadcast %cst_8 : f32 to vector<8x1xf32>
    %14 = arith.divf %12, %13 : vector<8x1xf32>
    %cst_9 = arith.constant 9.99999997E-7 : f32
    %15 = vector.broadcast %cst_9 : f32 to vector<8x1xf32>
    %16 = arith.addf %14, %15 : vector<8x1xf32>
    %17 = math.rsqrt %16 : vector<8x1xf32>
    %18 = vector.broadcast %17 : vector<8x1xf32> to vector<8x128xf32>
    %19 = arith.mulf %9, %18 : vector<8x128xf32>
    %20 = vector.broadcast %2 : vector<1x128xf32> to vector<8x128xf32>
    %21 = arith.mulf %19, %20 : vector<8x128xf32>
    %22 = vector.broadcast %3 : vector<1x128xf32> to vector<8x128xf32>
    %23 = arith.addf %21, %22 : vector<8x128xf32>
    %24 = arith.truncf %23 : vector<8x128xf32> to vector<8x128xbf16>
    %c0_10 = arith.constant 0 : index
    %c0_11 = arith.constant 0 : index
    %25 = vector.load %arg4[%c0_10, %c0_11] : memref<128x384xbf16, #tpu.memory_space<vmem>>, vector<128x384xbf16>
    %cst_12 = arith.constant dense<0.000000e+00> : vector<8x384xf32>
    %26 = tpu.matmul %24, %25, %cst_12 {dimension_numbers = #tpu.dot_dimension_numbers<[1], [0], [0], [1], [0, 0, 1, 1], [], []>} : vector<8x128xbf16>, vector<128x384xbf16>, vector<8x384xf32> -> vector<8x384xf32>
    %c0_13 = arith.constant 0 : index
    %c0_14 = arith.constant 0 : index
    %27 = vector.load %arg5[%c0_13, %c0_14] : memref<1x384xf32, #tpu.memory_space<vmem>>, vector<1x384xf32>
    %28 = vector.broadcast %27 : vector<1x384xf32> to vector<8x384xf32>
    %29 = arith.addf %26, %28 : vector<8x384xf32>
    %30 = arith.truncf %29 : vector<8x384xf32> to vector<8x384xbf16>
    %31 = vector.extract_strided_slice %30 {offsets = [0, 0], sizes = [8, 128], strides = [1, 1]} : vector<8x384xbf16> to vector<8x128xbf16>
    %32 = vector.shape_cast %31 : vector<8x128xbf16> to vector<8x4x32xbf16>
    %33 = tpu.transpose %32, [1, 0, 2] : vector<8x4x32xbf16> -> vector<4x8x32xbf16>
    %34 = vector.extract_strided_slice %30 {offsets = [0, 128], sizes = [8, 128], strides = [1, 1]} : vector<8x384xbf16> to vector<8x128xbf16>
    %35 = vector.shape_cast %34 : vector<8x128xbf16> to vector<8x4x32xbf16>
    %36 = tpu.transpose %35, [1, 0, 2] : vector<8x4x32xbf16> -> vector<4x8x32xbf16>
    %37 = vector.extract_strided_slice %30 {offsets = [0, 256], sizes = [8, 128], strides = [1, 1]} : vector<8x384xbf16> to vector<8x128xbf16>
    %38 = vector.shape_cast %37 : vector<8x128xbf16> to vector<8x4x32xbf16>
    %39 = tpu.transpose %38, [1, 0, 2] : vector<8x4x32xbf16> -> vector<4x8x32xbf16>
    "tpu.trace_start"() <{level = 10 : i32, message = "hqd,hkd->hqk"}> : () -> ()
    %cst_15 = arith.constant dense<0.000000e+00> : vector<4x8x8xf32>
    %40 = tpu.matmul %33, %36, %cst_15 {dimension_numbers = #tpu.dot_dimension_numbers<[2], [2], [1], [1], [0, 0, 0, 1, 1, 1], [0], [0]>} : vector<4x8x32xbf16>, vector<4x8x32xbf16>, vector<4x8x8xf32> -> vector<4x8x8xf32>
    "tpu.trace_stop"() : () -> ()
    %41 = tpu.iota {dimensions = array<i32: 2>} : vector<1x1x8xi32>
    %c5_i32 = arith.constant 5 : i32
    %42 = vector.broadcast %c5_i32 : i32 to vector<1x1x8xi32>
    %43 = arith.cmpi slt, %41, %42 : vector<1x1x8xi32>
    %cst_16 = arith.constant -1.000000e+30 : f32
    %44 = vector.shape_cast %43 : vector<1x1x8xi1> to vector<1x1x8xi1>
    %45 = vector.broadcast %44 : vector<1x1x8xi1> to vector<4x8x8xi1>
    %46 = vector.broadcast %cst_16 : f32 to vector<4x8x8xf32>
    %47 = arith.select %45, %40, %46 : vector<4x8x8xi1>, vector<4x8x8xf32>
    %cst_17 = arith.constant dense<0xFF800000> : vector<4x8xf32>
    %48 = vector.multi_reduction <maximumf>, %47, %cst_17 [2] : vector<4x8x8xf32> to vector<4x8xf32>
    %49 = vector.shape_cast %48 : vector<4x8xf32> to vector<4x8x1xf32>
    %50 = vector.broadcast %49 : vector<4x8x1xf32> to vector<4x8x8xf32>
    %51 = arith.subf %47, %50 : vector<4x8x8xf32>
    %52 = math.exp %51 : vector<4x8x8xf32>
    %cst_18 = arith.constant dense<0.000000e+00> : vector<4x8xf32>
    %53 = vector.multi_reduction <add>, %52, %cst_18 [2] : vector<4x8x8xf32> to vector<4x8xf32>
    %54 = vector.shape_cast %53 : vector<4x8xf32> to vector<4x8x1xf32>
    %55 = tpu.reciprocal %54 {approx = true} : vector<4x8x1xf32> -> vector<4x8x1xf32>
    %56 = vector.broadcast %55 : vector<4x8x1xf32> to vector<4x8x8xf32>
    %57 = arith.mulf %52, %56 : vector<4x8x8xf32>
    %58 = arith.truncf %57 : vector<4x8x8xf32> to vector<4x8x8xbf16>
    "tpu.trace_start"() <{level = 10 : i32, message = "hqk,hkd->hqd"}> : () -> ()
    %cst_19 = arith.constant dense<0.000000e+00> : vector<4x8x32xf32>
    %59 = tpu.matmul %58, %39, %cst_19 {dimension_numbers = #tpu.dot_dimension_numbers<[2], [1], [1], [2], [0, 0, 0, 1, 1, 2], [0], [0]>} : vector<4x8x8xbf16>, vector<4x8x32xbf16>, vector<4x8x32xf32> -> vector<4x8x32xf32>
    "tpu.trace_stop"() : () -> ()
    %60 = tpu.transpose %59, [1, 0, 2] : vector<4x8x32xf32> -> vector<8x4x32xf32>
    %61 = vector.shape_cast %60 : vector<8x4x32xf32> to vector<8x128xf32>
    %62 = arith.truncf %61 : vector<8x128xf32> to vector<8x128xbf16>
    %c0_20 = arith.constant 0 : index
    %c0_21 = arith.constant 0 : index
    %63 = vector.load %arg6[%c0_20, %c0_21] : memref<128x128xbf16, #tpu.memory_space<vmem>>, vector<128x128xbf16>
    %cst_22 = arith.constant dense<0.000000e+00> : vector<8x128xf32>
    %64 = tpu.matmul %62, %63, %cst_22 {dimension_numbers = #tpu.dot_dimension_numbers<[1], [0], [0], [1], [0, 0, 1, 1], [], []>} : vector<8x128xbf16>, vector<128x128xbf16>, vector<8x128xf32> -> vector<8x128xf32>
    %c0_23 = arith.constant 0 : index
    %c0_24 = arith.constant 0 : index
    %65 = vector.load %arg7[%c0_23, %c0_24] : memref<1x128xf32, #tpu.memory_space<vmem>>, vector<1x128xf32>
    %66 = vector.broadcast %65 : vector<1x128xf32> to vector<8x128xf32>
    %67 = arith.addf %64, %66 : vector<8x128xf32>
    %68 = arith.addf %1, %67 : vector<8x128xf32>
    %c0_25 = arith.constant 0 : index
    %c0_26 = arith.constant 0 : index
    %69 = vector.load %arg8[%c0_25, %c0_26] : memref<1x128xf32, #tpu.memory_space<vmem>>, vector<1x128xf32>
    %c0_27 = arith.constant 0 : index
    %c0_28 = arith.constant 0 : index
    %70 = vector.load %arg9[%c0_27, %c0_28] : memref<1x128xf32, #tpu.memory_space<vmem>>, vector<1x128xf32>
    %cst_29 = arith.constant dense<0.000000e+00> : vector<8xf32>
    %71 = vector.multi_reduction <add>, %68, %cst_29 [1] : vector<8x128xf32> to vector<8xf32>
    %72 = vector.shape_cast %71 : vector<8xf32> to vector<8x1xf32>
    %cst_30 = arith.constant 1.280000e+02 : f32
    %73 = vector.broadcast %cst_30 : f32 to vector<8x1xf32>
    %74 = arith.divf %72, %73 : vector<8x1xf32>
    %75 = vector.broadcast %74 : vector<8x1xf32> to vector<8x128xf32>
    %76 = arith.subf %68, %75 : vector<8x128xf32>
    %77 = arith.mulf %76, %76 : vector<8x128xf32>
    %cst_31 = arith.constant dense<0.000000e+00> : vector<8xf32>
    %78 = vector.multi_reduction <add>, %77, %cst_31 [1] : vector<8x128xf32> to vector<8xf32>
    %79 = vector.shape_cast %78 : vector<8xf32> to vector<8x1xf32>
    %cst_32 = arith.constant 1.280000e+02 : f32
    %80 = vector.broadcast %cst_32 : f32 to vector<8x1xf32>
    %81 = arith.divf %79, %80 : vector<8x1xf32>
    %cst_33 = arith.constant 9.99999997E-7 : f32
    %82 = vector.broadcast %cst_33 : f32 to vector<8x1xf32>
    %83 = arith.addf %81, %82 : vector<8x1xf32>
    %84 = math.rsqrt %83 : vector<8x1xf32>
    %85 = vector.broadcast %84 : vector<8x1xf32> to vector<8x128xf32>
    %86 = arith.mulf %76, %85 : vector<8x128xf32>
    %87 = vector.broadcast %69 : vector<1x128xf32> to vector<8x128xf32>
    %88 = arith.mulf %86, %87 : vector<8x128xf32>
    %89 = vector.broadcast %70 : vector<1x128xf32> to vector<8x128xf32>
    %90 = arith.addf %88, %89 : vector<8x128xf32>
    %91 = arith.truncf %90 : vector<8x128xf32> to vector<8x128xbf16>
    %c0_34 = arith.constant 0 : index
    %c0_35 = arith.constant 0 : index
    %92 = vector.load %arg10[%c0_34, %c0_35] : memref<128x256xbf16, #tpu.memory_space<vmem>>, vector<128x256xbf16>
    %cst_36 = arith.constant dense<0.000000e+00> : vector<8x256xf32>
    %93 = tpu.matmul %91, %92, %cst_36 {dimension_numbers = #tpu.dot_dimension_numbers<[1], [0], [0], [1], [0, 0, 1, 1], [], []>} : vector<8x128xbf16>, vector<128x256xbf16>, vector<8x256xf32> -> vector<8x256xf32>
    %c0_37 = arith.constant 0 : index
    %c0_38 = arith.constant 0 : index
    %94 = vector.load %arg11[%c0_37, %c0_38] : memref<1x256xf32, #tpu.memory_space<vmem>>, vector<1x256xf32>
    %95 = vector.broadcast %94 : vector<1x256xf32> to vector<8x256xf32>
    %96 = arith.addf %93, %95 : vector<8x256xf32>
    %cst_39 = arith.constant 5.000000e-01 : f32
    %97 = vector.broadcast %cst_39 : f32 to vector<8x256xf32>
    %98 = arith.mulf %97, %96 : vector<8x256xf32>
    %cst_40 = arith.constant 4.471500e-02 : f32
    %99 = vector.broadcast %cst_40 : f32 to vector<8x256xf32>
    %100 = arith.mulf %99, %96 : vector<8x256xf32>
    %101 = arith.mulf %100, %96 : vector<8x256xf32>
    %102 = arith.mulf %101, %96 : vector<8x256xf32>
    %103 = arith.addf %96, %102 : vector<8x256xf32>
    %cst_41 = arith.constant 0.797884583 : f32
    %104 = vector.broadcast %cst_41 : f32 to vector<8x256xf32>
    %105 = arith.mulf %104, %103 : vector<8x256xf32>
    %106 = math.tanh %105 : vector<8x256xf32>
    %cst_42 = arith.constant 1.000000e+00 : f32
    %107 = vector.broadcast %cst_42 : f32 to vector<8x256xf32>
    %108 = arith.addf %107, %106 : vector<8x256xf32>
    %109 = arith.mulf %98, %108 : vector<8x256xf32>
    %110 = arith.truncf %109 : vector<8x256xf32> to vector<8x256xbf16>
    %c0_43 = arith.constant 0 : index
    %c0_44 = arith.constant 0 : index
    %111 = vector.load %arg12[%c0_43, %c0_44] : memref<256x128xbf16, #tpu.memory_space<vmem>>, vector<256x128xbf16>
    %cst_45 = arith.constant dense<0.000000e+00> : vector<8x128xf32>
    %112 = tpu.matmul %110, %111, %cst_45 {dimension_numbers = #tpu.dot_dimension_numbers<[1], [0], [0], [1], [0, 0, 1, 1], [], []>} : vector<8x256xbf16>, vector<256x128xbf16>, vector<8x128xf32> -> vector<8x128xf32>
    %c0_46 = arith.constant 0 : index
    %c0_47 = arith.constant 0 : index
    %113 = vector.load %arg13[%c0_46, %c0_47] : memref<1x128xf32, #tpu.memory_space<vmem>>, vector<1x128xf32>
    %114 = vector.broadcast %113 : vector<1x128xf32> to vector<8x128xf32>
    %115 = arith.addf %112, %114 : vector<8x128xf32>
    %116 = arith.addf %68, %115 : vector<8x128xf32>
    %117 = tpu.iota {dimensions = array<i32: 0>} : vector<8x1xi32>
    %c5_i32_48 = arith.constant 5 : i32
    %118 = vector.broadcast %c5_i32_48 : i32 to vector<8x1xi32>
    %119 = arith.cmpi slt, %117, %118 : vector<8x1xi32>
    %cst_49 = arith.constant 0.000000e+00 : f32
    %120 = vector.shape_cast %119 : vector<8x1xi1> to vector<8x1xi1>
    %121 = vector.broadcast %120 : vector<8x1xi1> to vector<8x128xi1>
    %122 = vector.broadcast %cst_49 : f32 to vector<8x128xf32>
    %123 = arith.select %121, %116, %122 : vector<8x128xi1>, vector<8x128xf32>
    %c0_50 = arith.constant 0 : index
    %c0_51 = arith.constant 0 : index
    %c0_52 = arith.constant 0 : index
    %124 = vector.load %arg14[%c0_50, %c0_51, %c0_52] : memref<1x8x128xf32, #tpu.memory_space<vmem>>, vector<1x8x128xf32>
    %125 = vector.shape_cast %124 : vector<1x8x128xf32> to vector<8x128xf32>
    %126 = vector.shape_cast %123 : vector<8x128xf32> to vector<1x8x128xf32>
    tpu.vector_store %arg14[%c0_50, %c0_51, %c0_52], %126 {strides = array<i32>} : memref<1x8x128xf32, #tpu.memory_space<vmem>>, vector<1x8x128xf32>,
    return
  }
  func.func @transform_0(%arg0: i32) -> (i32, i32, i32) {
    %c0_i32 = arith.constant 0 : i32
    %c0_i32_0 = arith.constant 0 : i32
    %c0_i32_1 = arith.constant 0 : i32
    return %arg0, %c0_i32, %c0_i32_0 : i32, i32, i32
  }
  func.func @transform_1(%arg0: i32) -> (i32, i32) {
    %c0_i32 = arith.constant 0 : i32
    %c0_i32_0 = arith.constant 0 : i32
    %c0_i32_1 = arith.constant 0 : i32
    return %c0_i32, %c0_i32_0 : i32, i32
  }
  func.func @transform_2(%arg0: i32) -> (i32, i32) {
    %c0_i32 = arith.constant 0 : i32
    %c0_i32_0 = arith.constant 0 : i32
    %c0_i32_1 = arith.constant 0 : i32
    return %c0_i32, %c0_i32_0 : i32, i32
  }
  func.func @transform_3(%arg0: i32) -> (i32, i32) {
    %c0_i32 = arith.constant 0 : i32
    %c0_i32_0 = arith.constant 0 : i32
    %c0_i32_1 = arith.constant 0 : i32
    return %c0_i32, %c0_i32_0 : i32, i32
  }
  func.func @transform_4(%arg0: i32) -> (i32, i32) {
    %c0_i32 = arith.constant 0 : i32
    %c0_i32_0 = arith.constant 0 : i32
    %c0_i32_1 = arith.constant 0 : i32
    return %c0_i32, %c0_i32_0 : i32, i32
  }
  func.func @transform_5(%arg0: i32) -> (i32, i32) {
    %c0_i32 = arith.constant 0 : i32
    %c0_i32_0 = arith.constant 0 : i32
    %c0_i32_1 = arith.constant 0 : i32
    return %c0_i32, %c0_i32_0 : i32, i32
  }
  func.func @transform_6(%arg0: i32) -> (i32, i32) {
    %c0_i32 = arith.constant 0 : i32
    %c0_i32_0 = arith.constant 0 : i32
    %c0_i32_1 = arith.constant 0 : i32
    return %c0_i32, %c0_i32_0 : i32, i32
  }
  func.func @transform_7(%arg0: i32) -> (i32, i32) {
    %c0_i32 = arith.constant 0 : i32
    %c0_i32_0 = arith.constant 0 : i32
    %c0_i32_1 = arith.constant 0 : i32
    return %c0_i32, %c0_i32_0 : i32, i32
  }
  func.func @transform_8(%arg0: i32) -> (i32, i32) {
    %c0_i32 = arith.constant 0 : i32
    %c0_i32_0 = arith.constant 0 : i32
    %c0_i32_1 = arith.constant 0 : i32
    return %c0_i32, %c0_i32_0 : i32, i32
  }
  func.func @transform_9(%arg0: i32) -> (i32, i32) {
    %c0_i32 = arith.constant 0 : i32
    %c0_i32_0 = arith.constant 0 : i32
    %c0_i32_1 = arith.constant 0 : i32
    return %c0_i32, %c0_i32_0 : i32, i32
  }
  func.func @transform_10(%arg0: i32) -> (i32, i32) {
    %c0_i32 = arith.constant 0 : i32
    %c0_i32_0 = arith.constant 0 : i32
    %c0_i32_1 = arith.constant 0 : i32
    return %c0_i32, %c0_i32_0 : i32, i32
  }
  func.func @transform_11(%arg0: i32) -> (i32, i32) {
    %c0_i32 = arith.constant 0 : i32
    %c0_i32_0 = arith.constant 0 : i32
    %c0_i32_1 = arith.constant 0 : i32
    return %c0_i32, %c0_i32_0 : i32, i32
  }
  func.func @transform_12(%arg0: i32) -> (i32, i32) {
    %c0_i32 = arith.constant 0 : i32
    %c0_i32_0 = arith.constant 0 : i32
    %c0_i32_1 = arith.constant 0 : i32
    return %c0_i32, %c0_i32_0 : i32, i32
  }
  func.func @transform_13(%arg0: i32) -> (i32, i32, i32) {
    %c0_i32 = arith.constant 0 : i32
    %c0_i32_0 = arith.constant 0 : i32
    %c0_i32_1 = arith.constant 0 : i32
    return %arg0, %c0_i32, %c0_i32_0 : i32, i32, i32
  }
}

</mosaic_0001>

<llo_original>
// kernel: vit_forward.7
$region0: #{vit_forward.7}
  #allocation0 [shape = 'u32[]', space=smem, size = 0x4, offset = 0x4, fixed_abs, tag = 'smem constant byte address 0x4 - core index']
  #allocation1 [shape = 'u32[144,128]{1,0:T(1,128)}', space=vmem, size = 0x12000, scoped, tag = 'internal scratch']
  %s0 = inlined_call_operand.vmem [shape: f32[2,128], index: 0, kind: input, shape index: {}]
  %s1 = inlined_call_operand.vmem [shape: f32[1,128], index: 1, kind: input, shape index: {}]
  %s2 = inlined_call_operand.vmem [shape: f32[1,128], index: 2, kind: input, shape index: {}]
  %s3 = inlined_call_operand.hbm [shape: f32[2,128], index: 3, kind: output, shape index: {}]
  %s4 = sld [smem:[#allocation0]]
  $region22: #{vit_forward.7} parent=0
    _
  %s6 = ssub.s32 1, %s4
  %s7 = scalar_select 0, %s6, %s4
  $region1: #{vit_forward.7} parent=0
    #allocation2 [shape = 'u8[1024]{0}', space=vmem, size = 0x400, scoped, tag = 'output window, operand 0, single buffered']
    #allocation3 [shape = 's32[1]{0}', space=sflag, size = 0x4, scoped, tag = 'scoped memory for vit_forward.7']
    %8 = vsyncpa [#allocation3], 0
    // Predicated region
    $region2: #{vit_forward.7} parent=1 // pred_check
      _
    $region3: #{vit_forward.7} parent=1 // pred_check_branch
      %10 = sbr.rel (0) target = $region5
    $region4: #{vit_forward.7} parent=1 // pred_region
      _
    $region5: #{vit_forward.7} parent=1 // pred_fallthru
      _
    // Predicated region
    $region6: #{vit_forward.7} parent=1 // pred_check
      _
    $region7: #{vit_forward.7} parent=1 // pred_check_branch
      %12 = sbr.rel (0) target = $region9
    $region8: #{vit_forward.7} parent=1 // pred_region
      _
    $region9: #{vit_forward.7} parent=1 // pred_fallthru
      _
    // Predicated region
    $region10: #{vit_forward.7} parent=1 // pred_check
      _
    $region11: #{vit_forward.7} parent=1 // pred_check_branch
      %14 = sbr.rel (0) target = $region13
    $region12: #{vit_forward.7} parent=1 // pred_region
      _
    $region13: #{vit_forward.7} parent=1 // pred_fallthru
      _
    %v15 = vld [vmem:[%s0] sm:$0x3]
    %v16 = vld [vmem:[%s1] sm:$0x1]
    %v17 = vld [vmem:[%s2] sm:$0x1]
    %vm18 = vcmask 1041408
    %v19 = vsel %vm18, %v15, 0.0
    %20 = vadd.xlane.f32.xlu0 %v19
    %v21 = vpop.xlane.xlu0 %20
    %v22 = vrcp.pop 128.0
    %v23 = vmul.f32 %v21, %v22
    %v24 = vsub.f32 %v15, %v23
    %v25 = vmul.f32 %v24, %v24
    %v26 = vsel %vm18, %v25, 0.0
    %27 = vadd.xlane.f32.xlu0 %v26
    %v28 = vpop.xlane.xlu0 %27
    %v29 = vmul.f32 %v28, %v22
    %v30 = vadd.f32 %v29, 1e-06
    %v31 = vrsqrt.pop %v30
    %v32 = vmul.f32 %v24, %v31
    %v34 = vlaneseq
    %v35 = vshrl.u32 %v34, 7
    %v36 = vsub.s32 0, %v35
    %v37 = vrot.slane %v16, %v36
    %v39 = vmul.f32 %v32, %v37
    %v41 = vlaneseq
    %v42 = vshrl.u32 %v41, 7
    %v43 = vsub.s32 0, %v42
    %v44 = vrot.slane %v17, %v43
    %v46 = vadd.f32 %v39, %v44
    %47 = vst [vmem:[#allocation2] sm:$0x3] %v46
    // Predicated region
    $region14: #{vit_forward.7} parent=1 // pred_check
      _
    $region15: #{vit_forward.7} parent=1 // pred_check_branch
      %49 = sbr.rel (0) target = $region17
    $region16: #{vit_forward.7} parent=1 // pred_region
      %s51 = ssub.s32 32, 32
      %52 = vsyncadd [#allocation3], %s51
      %s54 = sshll.u32 [#allocation2], 4
      %s55 = int_to_ptr.vmem [resolvable:$true] %s54
      %57 = dma.vmem_to_hbm [thread:$0]  %s55, 32, %s3, [#allocation3]
    $region17: #{vit_forward.7} parent=1 // pred_fallthru
      _
    // Predicated region
    $region18: #{vit_forward.7} parent=1 // pred_check
      _
    $region19: #{vit_forward.7} parent=1 // pred_check_branch
      %59 = sbr.rel (0) target = $region21
    $region20: #{vit_forward.7} parent=1 // pred_region
      %60 = dma.done [#allocation3], 32
    $region21: #{vit_forward.7} parent=1 // pred_fallthru
      _
    %61 = vsyncpa [#allocation3], 1

// kernel: vit_forward.4
$region0: #{vit_forward.4}
  #allocation0 [shape = 'u32[]', space=smem, size = 0x4, offset = 0x4, fixed_abs, tag = 'smem constant byte address 0x4 - core index']
  #allocation1 [shape = 'u32[144,128]{1,0:T(1,128)}', space=vmem, size = 0x12000, scoped, tag = 'internal scratch']
  %s0 = inlined_call_operand.vmem [shape: bf16[2,8,192], index: 0, kind: input, shape index: {}]
  %s1 = inlined_call_operand.vmem [shape: bf16[192,128], index: 1, kind: input, shape index: {}]
  %s2 = inlined_call_operand.vmem [shape: f32[8,128], index: 2, kind: input, shape index: {}]
  %s3 = inlined_call_operand.vmem [shape: f32[2,8,128], index: 3, kind: output, shape index: {}]
  %s4 = sld [smem:[#allocation0]]
  $region45: #{vit_forward.4} parent=0
    _
  %s6 = ssub.s32 1, %s4
  %s7 = scalar_select 0, %s6, %s4
  loop: start=0, step=1, limit=4
  $region2: #{vit_forward.4} parent=0 // loop_pre_header
    _
  $region3: #{vit_forward.4} parent=0 // loop_header
    %s9 = sphi 0, %s13
    %p10 = scmp.ge.s32.totalorder %s9, 4
    %s19 = sphi 0, %s21
    %s22 = sphi 0, %s19
    %s23 = sphi 0, %s22
    %s39 = sphi 0, %s23
    %s43 = sphi 0, %s43
    %s45 = sphi 0, %s43
    %s46 = sphi 0, %s45
    %s60 = sphi 0, %s46
    %s64 = sphi 0, %s64
    %s66 = sphi 0, %s64
    %s67 = sphi 0, %s66
    %s81 = sphi 0, %s67
    %s87 = sphi 0, %s89
    %s90 = sphi 0, %s87
    %s91 = sphi 0, %s90
    %s107 = sphi 0, %s91
  $region4: #{vit_forward.4} parent=0 // loop_header_branch
    %12 = sbr.rel (%p10) target = $region8
  $region5: #{vit_forward.4} parent=0 // loop_body
    %s14 = ssub.s32 %s9, 1
    %s15 = ssub.s32 %s9, 2
    %s16 = sadd.s32 %s9, 1
    %s17 = ssub.s32 %s9, %s16
    %p18 = scmp.eq.s32.totalorder %s17, 0
    %s20 = sadd.s32 %s19, 1
    %s21 = scalar_select %p18, %s19, %s20
    %p24 = pneg %p18
    %p25 = scmp.eq.s32.totalorder %s9, 1
    %p26 = por %p24, %p25
    %p27 = scmp.ne.s32.totalorder %s19, %s22
    %p28 = scmp.eq.s32.totalorder %s9, 0
    %p29 = por %p27, %p28
    %p30 = scmp.ne.s32.totalorder %s19, %s22
    %p31 = scmp.eq.s32.totalorder %s14, 1
    %p32 = por %p30, %p31
    %p33 = scmp.ne.s32.totalorder %s22, %s23
    %p34 = scmp.eq.s32.totalorder %s14, 0
    %p35 = por %p33, %p34
    %p36 = scmp.ne.s32.totalorder %s22, %s23
    %p37 = scmp.eq.s32.totalorder %s15, 1
    %p38 = por %p36, %p37
    %p40 = scmp.ne.s32.totalorder %s23, %s39
    %p41 = scmp.eq.s32.totalorder %s15, 0
    %p42 = por %p40, %p41
    %s44 = sadd.s32 %s43, 1
    %p47 = scmp.eq.s32.totalorder %s9, 1
    %p48 = scmp.ne.s32.totalorder %s43, %s45
    %p49 = scmp.eq.s32.totalorder %s9, 0
    %p50 = por %p48, %p49
    %p51 = scmp.ne.s32.totalorder %s43, %s45
    %p52 = scmp.eq.s32.totalorder %s14, 1
    %p53 = por %p51, %p52
    %p54 = scmp.ne.s32.totalorder %s45, %s46
    %p55 = scmp.eq.s32.totalorder %s14, 0
    %p56 = por %p54, %p55
    %p57 = scmp.ne.s32.totalorder %s45, %s46
    %p58 = scmp.eq.s32.totalorder %s15, 1
    %p59 = por %p57, %p58
    %p61 = scmp.ne.s32.totalorder %s46, %s60
    %p62 = scmp.eq.s32.totalorder %s15, 0
    %p63 = por %p61, %p62
    %s65 = sadd.s32 %s64, 1
    %p68 = scmp.eq.s32.totalorder %s9, 1
    %p69 = scmp.ne.s32.totalorder %s64, %s66
    %p70 = scmp.eq.s32.totalorder %s9, 0
    %p71 = por %p69, %p70
    %p72 = scmp.ne.s32.totalorder %s64, %s66
    %p73 = scmp.eq.s32.totalorder %s14, 1
    %p74 = por %p72, %p73
    %p75 = scmp.ne.s32.totalorder %s66, %s67
    %p76 = scmp.eq.s32.totalorder %s14, 0
    %p77 = por %p75, %p76
    %p78 = scmp.ne.s32.totalorder %s66, %s67
    %p79 = scmp.eq.s32.totalorder %s15, 1
    %p80 = por %p78, %p79
    %p82 = scmp.ne.s32.totalorder %s67, %s81
    %p83 = scmp.eq.s32.totalorder %s15, 0
    %p84 = por %p82, %p83
    %s85 = ssub.s32 %s9, %s16
    %p86 = scmp.eq.s32.totalorder %s85, 0
    %s88 = sadd.s32 %s87, 1
    %s89 = scalar_select %p86, %s87, %s88
    %p92 = pneg %p86
    %p93 = scmp.eq.s32.totalorder %s9, 1
    %p94 = por %p92, %p93
    %p95 = scmp.ne.s32.totalorder %s87, %s90
    %p96 = scmp.eq.s32.totalorder %s9, 0
    %p97 = por %p95, %p96
    %p98 = scmp.ne.s32.totalorder %s87, %s90
    %p99 = scmp.eq.s32.totalorder %s14, 1
    %p100 = por %p98, %p99
    %p101 = scmp.ne.s32.totalorder %s90, %s91
    %p102 = scmp.eq.s32.totalorder %s14, 0
    %p103 = por %p101, %p102
    %p104 = scmp.ne.s32.totalorder %s90, %s91
    %p105 = scmp.eq.s32.totalorder %s15, 1
    %p106 = por %p104, %p105
    %p108 = scmp.ne.s32.totalorder %s91, %s107
    %p109 = scmp.eq.s32.totalorder %s15, 0
    %p110 = por %p108, %p109
    %p111 = scmp.le.s32.totalorder 1, %s9
    %p112 = scmp.lt.s32.totalorder %s9, 3
    %p113 = pnand %p111, %p112
    %p114 = pneg %p113
    // Predicated region
    $region9: #{vit_forward.4} parent=5 // pred_check
      _
    $region10: #{vit_forward.4} parent=5 // pred_check_branch
      %116 = sbr.rel (%p113) target = $region12
    $region11: #{vit_forward.4} parent=5 // pred_region
      %s117 = ssub.s32 %s9, 1
      // Predicated region
      $region13: #{vit_forward.4} parent=11 // pred_check
        %p118 = pneg %p56
      $region14: #{vit_forward.4} parent=11 // pred_check_branch
        %120 = sbr.rel (%p118) target = $region16
      $region15: #{vit_forward.4} parent=11 // pred_region
        _
      $region16: #{vit_forward.4} parent=11 // pred_fallthru
        _
      // Predicated region
      $region17: #{vit_forward.4} parent=11 // pred_check
        %p121 = pneg %p77
      $region18: #{vit_forward.4} parent=11 // pred_check_branch
        %123 = sbr.rel (%p121) target = $region20
      $region19: #{vit_forward.4} parent=11 // pred_region
        _
      $region20: #{vit_forward.4} parent=11 // pred_fallthru
        _
    $region12: #{vit_forward.4} parent=5 // pred_fallthru
      _
    %p124 = scmp.lt.s32.totalorder %s9, 2
    // Predicated region
    $region21: #{vit_forward.4} parent=5 // pred_check
      %p125 = pneg %p124
    $region22: #{vit_forward.4} parent=5 // pred_check_branch
      %127 = sbr.rel (%p125) target = $region24
    $region23: #{vit_forward.4} parent=5 // pred_region
      // Predicated region
      $region25: #{vit_forward.4} parent=23 // pred_check
        %p128 = pneg %p29
      $region26: #{vit_forward.4} parent=23 // pred_check_branch
        %130 = sbr.rel (%p128) target = $region28
      $region27: #{vit_forward.4} parent=23 // pred_region
        %p131 = scmp.lt.s32.totalorder %s9, 1
        %s132 = scalar_select %p131, %s9, 1
        %s133 = smul.addr %s132, 2
        %s134 = smul.addr %s133, 4
        %s135 = scalar_lea.vmem %s0, %s134
      $region28: #{vit_forward.4} parent=23 // pred_fallthru
        _
    $region24: #{vit_forward.4} parent=5 // pred_fallthru
      _
    %p136 = scmp.le.s32.totalorder 1, %s9
    %p137 = scmp.lt.s32.totalorder %s9, 3
    %p138 = pnand %p136, %p137
    %p139 = pneg %p138
    // Predicated region
    $region29: #{vit_forward.4} parent=5 // pred_check
      _
    $region30: #{vit_forward.4} parent=5 // pred_check_branch
      %141 = sbr.rel (%p138) target = $region32
    $region31: #{vit_forward.4} parent=5 // pred_region
      %s142 = ssub.s32 %s9, 1
      %p143 = scmp.lt.s32.totalorder %s14, 1
      %s144 = scalar_select %p143, %s14, 1
      %s145 = smul.addr %s144, 2
      %s146 = smul.addr %s145, 4
      %s147 = scalar_lea.vmem %s0, %s146
      %p148 = pneg %p35
      %p149 = pneg %p32
      %p150 = pneg %p56
      %p151 = pneg %p53
      %p152 = pneg %p77
      %p153 = pneg %p74
      %p154 = pneg %p103
      %p155 = pneg %p100
      %p156 = scmp.lt.s32.totalorder %s14, 1
      %s157 = scalar_select %p156, %s14, 1
      %s158 = smul.addr %s157, 8
      %s159 = scalar_lea.vmem %s3, %s158
      %p160 = scmp.lt.s32.totalorder %s14, 1
      %s161 = scalar_select %p160, %s14, 1
      %s162 = smul.addr %s161, 2
      %s163 = smul.addr %s162, 4
      %s164 = scalar_lea.vmem %s0, %s163
      %p165 = scmp.lt.s32.totalorder %s14, 1
      %s166 = scalar_select %p165, %s14, 1
      %s167 = smul.addr %s166, 8
      %s168 = scalar_lea.vmem %s3, %s167
      %v170 = vld [vmem:[%s164] sm:$0xff]
      %v171 = vld [vmem:[%s1] sm:$0xf]
      %v172 = vld [vmem:[%s1 + $0x4] sm:$0xf]
      %v173 = vld [vmem:[%s1 + $0x8] sm:$0xf]
      %v174 = vld [vmem:[%s1 + $0xc] sm:$0xf]
      %v175 = vld [vmem:[%s1 + $0x10] sm:$0xf]
      %v176 = vld [vmem:[%s1 + $0x14] sm:$0xf]
      %v177 = vld [vmem:[%s1 + $0x18] sm:$0xf]
      %v178 = vld [vmem:[%s1 + $0x1c] sm:$0xf]
      %v179 = vld [vmem:[%s1 + $0x20] sm:$0xf]
      %v180 = vld [vmem:[%s1 + $0x24] sm:$0xf]
      %v181 = vld [vmem:[%s1 + $0x28] sm:$0xf]
      %v182 = vld [vmem:[%s1 + $0x2c] sm:$0xf]
      %v183 = vld [vmem:[%s1 + $0x30] sm:$0xf]
      %v184 = vld [vmem:[%s1 + $0x34] sm:$0xf]
      %v185 = vld [vmem:[%s1 + $0x38] sm:$0xf]
      %v186 = vld [vmem:[%s1 + $0x3c] sm:$0xf]
      %v187 = vld [vmem:[%s1 + $0x40] sm:$0xf]
      %v188 = vld [vmem:[%s1 + $0x44] sm:$0xf]
      %v189 = vld [vmem:[%s1 + $0x48] sm:$0xf]
      %v190 = vld [vmem:[%s1 + $0x4c] sm:$0xf]
      %v191 = vld [vmem:[%s1 + $0x50] sm:$0xf]
      %v192 = vld [vmem:[%s1 + $0x54] sm:$0xf]
      %v193 = vld [vmem:[%s1 + $0x58] sm:$0xf]
      %v194 = vld [vmem:[%s1 + $0x5c] sm:$0xf]
      %v195 = vld [vmem:[%s2] sm:$0xff]
      %v197 = vunpack.c.l.b16 %v170
      %v198 = vunpack.c.h.b16 %v170
      %v199 = vpack.c.b16 %v197, %v197
      %v200 = vpack.c.b16 %v198, %v198
      %v226 = vunpack.c.l.b16 %v171
      %v227 = vunpack.c.l.b16 %v172
      %v228 = vunpack.c.l.b16 %v173
      %v229 = vunpack.c.l.b16 %v174
      %v230 = vunpack.c.l.b16 %v175
      %v231 = vunpack.c.l.b16 %v176
      %v232 = vunpack.c.l.b16 %v177
      %v233 = vunpack.c.l.b16 %v178
      %v234 = vunpack.c.l.b16 %v179
      %v235 = vunpack.c.l.b16 %v180
      %v236 = vunpack.c.l.b16 %v181
      %v237 = vunpack.c.l.b16 %v182
      %v238 = vunpack.c.l.b16 %v183
      %v239 = vunpack.c.l.b16 %v184
      %v240 = vunpack.c.l.b16 %v185
      %v241 = vunpack.c.l.b16 %v186
      %v242 = vunpack.c.l.b16 %v187
      %v243 = vunpack.c.l.b16 %v188
      %v244 = vunpack.c.l.b16 %v189
      %v245 = vunpack.c.l.b16 %v190
      %v246 = vunpack.c.l.b16 %v191
      %v247 = vunpack.c.l.b16 %v192
      %v248 = vunpack.c.l.b16 %v193
      %v249 = vunpack.c.l.b16 %v194
      %v250 = vpack.c.b16 %v227, %v226
      %v251 = vpack.c.b16 %v229, %v228
      %v252 = vpack.c.b16 %v231, %v230
      %v253 = vpack.c.b16 %v233, %v232
      %v254 = vpack.c.b16 %v235, %v234
      %v255 = vpack.c.b16 %v237, %v236
      %v256 = vpack.c.b16 %v239, %v238
      %v257 = vpack.c.b16 %v241, %v240
      %v258 = vpack.c.b16 %v243, %v242
      %v259 = vpack.c.b16 %v245, %v244
      %v260 = vpack.c.b16 %v247, %v246
      %v261 = vpack.c.b16 %v249, %v248
      %vm274 = vcmask 523264
      %v276 = vsel %vm274, %v200, 0
      %278 = vmatprep.subr.bf16.mxu0 0
      %279 = vmatpush1.bf16.msra.mxu0 %v257
      %280 = vmatprep.subr.bf16.mxu0 0
      %281 = vmatpush1.bf16.msra.mxu0 %v256
      %282 = vmatprep.subr.bf16.mxu0 0
      %283 = vmatpush1.bf16.msra.mxu0 %v255
      %284 = vmatprep.subr.bf16.mxu0 0
      %285 = vmatpush1.bf16.msra.mxu0 %v254
      %286 = vmatprep.subr.bf16.mxu0 0
      %287 = vmatpush1.bf16.msra.mxu0 %v253
      %288 = vmatprep.subr.bf16.mxu0 0
      %289 = vmatpush1.bf16.msra.mxu0 %v252
      %290 = vmatprep.subr.bf16.mxu0 0
      %291 = vmatpush1.bf16.msra.mxu0 %v251
      %292 = vmatprep.subr.bf16.mxu0 0
      %293 = vmatpush1.bf16.msra.mxu0 %v250
      %294 = vmatprep.subr.bf16.mxu0 0
      %295 = vmatpush2.bf16.msra.mxu0 0
      %296 = vmatprep.subr.bf16.mxu0 0
      %297 = vmatpush2.bf16.msra.mxu0 0
      %298 = vmatprep.subr.bf16.mxu0 0
      %299 = vmatpush2.bf16.msra.mxu0 0
      %300 = vmatprep.subr.bf16.mxu0 0
      %301 = vmatpush2.bf16.msra.mxu0 0
      %302 = vmatprep.subr.bf16.mxu0 0
      %303 = vmatpush2.bf16.msra.mxu0 %v261
      %304 = vmatprep.subr.bf16.mxu0 0
      %305 = vmatpush2.bf16.msra.mxu0 %v260
      %306 = vmatprep.subr.bf16.mxu0 0
      %307 = vmatpush2.bf16.msra.mxu0 %v259
      %308 = vmatprep.subr.bf16.mxu0 0
      %309 = vmatpush2.bf16.msra.mxu0 %v258
      %310 = vmatprep.mubr.bf16.mxu0 %v276
      %311 = vmatmul.mubr.bf16.gmra.mxu0 %v199
      %v312 = vpop.f32.mrf.mxu0
      %v313 = vadd.f32 %v195, %v312
      %v314 = vpop.f32.mrf.mxu0
      %v315 = vpop.f32.mrf.mxu0
      %v316 = vpop.f32.mrf.mxu0
      %317 = vdwg.mxu0
      %318 = vst [vmem:[%s168] sm:$0xff] %v313
      %p319 = scmp.lt.s32.totalorder %s14, 1
      %s320 = scalar_select %p319, %s14, 1
      %s321 = smul.addr %s320, 8
      %s322 = scalar_lea.vmem %s3, %s321
      // Predicated region
      $region33: #{vit_forward.4} parent=31 // pred_check
        %p323 = pneg %p100
      $region34: #{vit_forward.4} parent=31 // pred_check_branch
        %325 = sbr.rel (%p323) target = $region36
      $region35: #{vit_forward.4} parent=31 // pred_region
        _
      $region36: #{vit_forward.4} parent=31 // pred_fallthru
        _
    $region32: #{vit_forward.4} parent=5 // pred_fallthru
      _
    %p326 = scmp.le.s32.totalorder 2, %s9
    // Predicated region
    $region37: #{vit_forward.4} parent=5 // pred_check
      %p327 = pneg %p326
    $region38: #{vit_forward.4} parent=5 // pred_check_branch
      %329 = sbr.rel (%p327) target = $region40
    $region39: #{vit_forward.4} parent=5 // pred_region
      %s330 = ssub.s32 %s9, 2
      // Predicated region
      $region41: #{vit_forward.4} parent=39 // pred_check
        %p331 = pneg %p106
      $region42: #{vit_forward.4} parent=39 // pred_check_branch
        %333 = sbr.rel (%p331) target = $region44
      $region43: #{vit_forward.4} parent=39 // pred_region
        %p334 = scmp.lt.s32.totalorder %s15, 1
        %s335 = scalar_select %p334, %s15, 1
        %s336 = smul.addr %s335, 8
        %s337 = scalar_lea.vmem %s3, %s336
      $region44: #{vit_forward.4} parent=39 // pred_fallthru
        _
    $region40: #{vit_forward.4} parent=5 // pred_fallthru
      _
  $region6: #{vit_forward.4} parent=0 // loop_footer
    %s13 = sadd.s32 1, %s9
  $region7: #{vit_forward.4} parent=0 // loop_footer_branch
    %8 = sbr.rel target = $region3
  $region8: #{vit_forward.4} parent=0 // loop_exit
    _

// kernel: vit_forward.5
$region0: #{vit_forward.5}
  #allocation0 [shape = 'u32[]', space=smem, size = 0x4, offset = 0x4, fixed_abs, tag = 'smem constant byte address 0x4 - core index']
  #allocation1 [shape = 'u32[144,128]{1,0:T(1,128)}', space=vmem, size = 0x12000, scoped, tag = 'internal scratch']
  %s0 = inlined_call_operand.vmem [shape: f32[2,8,128], index: 0, kind: input, shape index: {}]
  %s1 = inlined_call_operand.vmem [shape: f32[1,128], index: 1, kind: input, shape index: {}]
  %s2 = inlined_call_operand.vmem [shape: f32[1,128], index: 2, kind: input, shape index: {}]
  %s3 = inlined_call_operand.vmem [shape: bf16[128,384], index: 3, kind: input, shape index: {}]
  %s4 = inlined_call_operand.vmem [shape: f32[1,384], index: 4, kind: input, shape index: {}]
  %s5 = inlined_call_operand.vmem [shape: bf16[128,128], index: 5, kind: input, shape index: {}]
  %s6 = inlined_call_operand.vmem [shape: f32[1,128], index: 6, kind: input, shape index: {}]
  %s7 = inlined_call_operand.vmem [shape: f32[1,128], index: 7, kind: input, shape index: {}]
  %s8 = inlined_call_operand.vmem [shape: f32[1,128], index: 8, kind: input, shape index: {}]
  %s9 = inlined_call_operand.vmem [shape: bf16[128,256], index: 9, kind: input, shape index: {}]
  %s10 = inlined_call_operand.vmem [shape: f32[1,256], index: 10, kind: input, shape index: {}]
  %s11 = inlined_call_operand.vmem [shape: bf16[256,128], index: 11, kind: input, shape index: {}]
  %s12 = inlined_call_operand.vmem [shape: f32[1,128], index: 12, kind: input, shape index: {}]
  %s13 = inlined_call_operand.vmem [shape: f32[2,8,128], index: 13, kind: output, shape index: {}]
  %s14 = sld [smem:[#allocation0]]
  $region85: #{vit_forward.5} parent=0
    _
  %s16 = ssub.s32 1, %s14
  %s17 = scalar_select 0, %s16, %s14
  loop: start=0, step=1, limit=4
  $region2: #{vit_forward.5} parent=0 // loop_pre_header
    _
  $region3: #{vit_forward.5} parent=0 // loop_header
    %s19 = sphi 0, %s23
    %p20 = scmp.ge.s32.totalorder %s19, 4
    %s29 = sphi 0, %s31
    %s32 = sphi 0, %s29
    %s33 = sphi 0, %s32
    %s49 = sphi 0, %s33
    %s53 = sphi 0, %s53
    %s55 = sphi 0, %s53
    %s56 = sphi 0, %s55
    %s70 = sphi 0, %s56
    %s74 = sphi 0, %s74
    %s76 = sphi 0, %s74
    %s77 = sphi 0, %s76
    %s91 = sphi 0, %s77
    %s95 = sphi 0, %s95
    %s97 = sphi 0, %s95
    %s98 = sphi 0, %s97
    %s112 = sphi 0, %s98
    %s116 = sphi 0, %s116
    %s118 = sphi 0, %s116
    %s119 = sphi 0, %s118
    %s133 = sphi 0, %s119
    %s137 = sphi 0, %s137
    %s139 = sphi 0, %s137
    %s140 = sphi 0, %s139
    %s154 = sphi 0, %s140
    %s158 = sphi 0, %s158
    %s160 = sphi 0, %s158
    %s161 = sphi 0, %s160
    %s175 = sphi 0, %s161
    %s179 = sphi 0, %s179
    %s181 = sphi 0, %s179
    %s182 = sphi 0, %s181
    %s196 = sphi 0, %s182
    %s200 = sphi 0, %s200
    %s202 = sphi 0, %s200
    %s203 = sphi 0, %s202
    %s217 = sphi 0, %s203
    %s221 = sphi 0, %s221
    %s223 = sphi 0, %s221
    %s224 = sphi 0, %s223
    %s238 = sphi 0, %s224
    %s242 = sphi 0, %s242
    %s244 = sphi 0, %s242
    %s245 = sphi 0, %s244
    %s259 = sphi 0, %s245
    %s263 = sphi 0, %s263
    %s265 = sphi 0, %s263
    %s266 = sphi 0, %s265
    %s280 = sphi 0, %s266
    %s284 = sphi 0, %s284
    %s286 = sphi 0, %s284
    %s287 = sphi 0, %s286
    %s301 = sphi 0, %s287
    %s307 = sphi 0, %s309
    %s310 = sphi 0, %s307
    %s311 = sphi 0, %s310
    %s327 = sphi 0, %s311
  $region4: #{vit_forward.5} parent=0 // loop_header_branch
    %22 = sbr.rel (%p20) target = $region8
  $region5: #{vit_forward.5} parent=0 // loop_body
    %s24 = ssub.s32 %s19, 1
    %s25 = ssub.s32 %s19, 2
    %s26 = sadd.s32 %s19, 1
    %s27 = ssub.s32 %s19, %s26
    %p28 = scmp.eq.s32.totalorder %s27, 0
    %s30 = sadd.s32 %s29, 1
    %s31 = scalar_select %p28, %s29, %s30
    %p34 = pneg %p28
    %p35 = scmp.eq.s32.totalorder %s19, 1
    %p36 = por %p34, %p35
    %p37 = scmp.ne.s32.totalorder %s29, %s32
    %p38 = scmp.eq.s32.totalorder %s19, 0
    %p39 = por %p37, %p38
    %p40 = scmp.ne.s32.totalorder %s29, %s32
    %p41 = scmp.eq.s32.totalorder %s24, 1
    %p42 = por %p40, %p41
    %p43 = scmp.ne.s32.totalorder %s32, %s33
    %p44 = scmp.eq.s32.totalorder %s24, 0
    %p45 = por %p43, %p44
    %p46 = scmp.ne.s32.totalorder %s32, %s33
    %p47 = scmp.eq.s32.totalorder %s25, 1
    %p48 = por %p46, %p47
    %p50 = scmp.ne.s32.totalorder %s33, %s49
    %p51 = scmp.eq.s32.totalorder %s25, 0
    %p52 = por %p50, %p51
    %s54 = sadd.s32 %s53, 1
    %p57 = scmp.eq.s32.totalorder %s19, 1
    %p58 = scmp.ne.s32.totalorder %s53, %s55
    %p59 = scmp.eq.s32.totalorder %s19, 0
    %p60 = por %p58, %p59
    %p61 = scmp.ne.s32.totalorder %s53, %s55
    %p62 = scmp.eq.s32.totalorder %s24, 1
    %p63 = por %p61, %p62
    %p64 = scmp.ne.s32.totalorder %s55, %s56
    %p65 = scmp.eq.s32.totalorder %s24, 0
    %p66 = por %p64, %p65
    %p67 = scmp.ne.s32.totalorder %s55, %s56
    %p68 = scmp.eq.s32.totalorder %s25, 1
    %p69 = por %p67, %p68
    %p71 = scmp.ne.s32.totalorder %s56, %s70
    %p72 = scmp.eq.s32.totalorder %s25, 0
    %p73 = por %p71, %p72
    %s75 = sadd.s32 %s74, 1
    %p78 = scmp.eq.s32.totalorder %s19, 1
    %p79 = scmp.ne.s32.totalorder %s74, %s76
    %p80 = scmp.eq.s32.totalorder %s19, 0
    %p81 = por %p79, %p80
    %p82 = scmp.ne.s32.totalorder %s74, %s76
    %p83 = scmp.eq.s32.totalorder %s24, 1
    %p84 = por %p82, %p83
    %p85 = scmp.ne.s32.totalorder %s76, %s77
    %p86 = scmp.eq.s32.totalorder %s24, 0
    %p87 = por %p85, %p86
    %p88 = scmp.ne.s32.totalorder %s76, %s77
    %p89 = scmp.eq.s32.totalorder %s25, 1
    %p90 = por %p88, %p89
    %p92 = scmp.ne.s32.totalorder %s77, %s91
    %p93 = scmp.eq.s32.totalorder %s25, 0
    %p94 = por %p92, %p93
    %s96 = sadd.s32 %s95, 1
    %p99 = scmp.eq.s32.totalorder %s19, 1
    %p100 = scmp.ne.s32.totalorder %s95, %s97
    %p101 = scmp.eq.s32.totalorder %s19, 0
    %p102 = por %p100, %p101
    %p103 = scmp.ne.s32.totalorder %s95, %s97
    %p104 = scmp.eq.s32.totalorder %s24, 1
    %p105 = por %p103, %p104
    %p106 = scmp.ne.s32.totalorder %s97, %s98
    %p107 = scmp.eq.s32.totalorder %s24, 0
    %p108 = por %p106, %p107
    %p109 = scmp.ne.s32.totalorder %s97, %s98
    %p110 = scmp.eq.s32.totalorder %s25, 1
    %p111 = por %p109, %p110
    %p113 = scmp.ne.s32.totalorder %s98, %s112
    %p114 = scmp.eq.s32.totalorder %s25, 0
    %p115 = por %p113, %p114
    %s117 = sadd.s32 %s116, 1
    %p120 = scmp.eq.s32.totalorder %s19, 1
    %p121 = scmp.ne.s32.totalorder %s116, %s118
    %p122 = scmp.eq.s32.totalorder %s19, 0
    %p123 = por %p121, %p122
    %p124 = scmp.ne.s32.totalorder %s116, %s118
    %p125 = scmp.eq.s32.totalorder %s24, 1
    %p126 = por %p124, %p125
    %p127 = scmp.ne.s32.totalorder %s118, %s119
    %p128 = scmp.eq.s32.totalorder %s24, 0
    %p129 = por %p127, %p128
    %p130 = scmp.ne.s32.totalorder %s118, %s119
    %p131 = scmp.eq.s32.totalorder %s25, 1
    %p132 = por %p130, %p131
    %p134 = scmp.ne.s32.totalorder %s119, %s133
    %p135 = scmp.eq.s32.totalorder %s25, 0
    %p136 = por %p134, %p135
    %s138 = sadd.s32 %s137, 1
    %p141 = scmp.eq.s32.totalorder %s19, 1
    %p142 = scmp.ne.s32.totalorder %s137, %s139
    %p143 = scmp.eq.s32.totalorder %s19, 0
    %p144 = por %p142, %p143
    %p145 = scmp.ne.s32.totalorder %s137, %s139
    %p146 = scmp.eq.s32.totalorder %s24, 1
    %p147 = por %p145, %p146
    %p148 = scmp.ne.s32.totalorder %s139, %s140
    %p149 = scmp.eq.s32.totalorder %s24, 0
    %p150 = por %p148, %p149
    %p151 = scmp.ne.s32.totalorder %s139, %s140
    %p152 = scmp.eq.s32.totalorder %s25, 1
    %p153 = por %p151, %p152
    %p155 = scmp.ne.s32.totalorder %s140, %s154
    %p156 = scmp.eq.s32.totalorder %s25, 0
    %p157 = por %p155, %p156
    %s159 = sadd.s32 %s158, 1
    %p162 = scmp.eq.s32.totalorder %s19, 1
    %p163 = scmp.ne.s32.totalorder %s158, %s160
    %p164 = scmp.eq.s32.totalorder %s19, 0
    %p165 = por %p163, %p164
    %p166 = scmp.ne.s32.totalorder %s158, %s160
    %p167 = scmp.eq.s32.totalorder %s24, 1
    %p168 = por %p166, %p167
    %p169 = scmp.ne.s32.totalorder %s160, %s161
    %p170 = scmp.eq.s32.totalorder %s24, 0
    %p171 = por %p169, %p170
    %p172 = scmp.ne.s32.totalorder %s160, %s161
    %p173 = scmp.eq.s32.totalorder %s25, 1
    %p174 = por %p172, %p173
    %p176 = scmp.ne.s32.totalorder %s161, %s175
    %p177 = scmp.eq.s32.totalorder %s25, 0
    %p178 = por %p176, %p177
    %s180 = sadd.s32 %s179, 1
    %p183 = scmp.eq.s32.totalorder %s19, 1
    %p184 = scmp.ne.s32.totalorder %s179, %s181
    %p185 = scmp.eq.s32.totalorder %s19, 0
    %p186 = por %p184, %p185
    %p187 = scmp.ne.s32.totalorder %s179, %s181
    %p188 = scmp.eq.s32.totalorder %s24, 1
    %p189 = por %p187, %p188
    %p190 = scmp.ne.s32.totalorder %s181, %s182
    %p191 = scmp.eq.s32.totalorder %s24, 0
    %p192 = por %p190, %p191
    %p193 = scmp.ne.s32.totalorder %s181, %s182
    %p194 = scmp.eq.s32.totalorder %s25, 1
    %p195 = por %p193, %p194
    %p197 = scmp.ne.s32.totalorder %s182, %s196
    %p198 = scmp.eq.s32.totalorder %s25, 0
    %p199 = por %p197, %p198
    %s201 = sadd.s32 %s200, 1
    %p204 = scmp.eq.s32.totalorder %s19, 1
    %p205 = scmp.ne.s32.totalorder %s200, %s202
    %p206 = scmp.eq.s32.totalorder %s19, 0
    %p207 = por %p205, %p206
    %p208 = scmp.ne.s32.totalorder %s200, %s202
    %p209 = scmp.eq.s32.totalorder %s24, 1
    %p210 = por %p208, %p209
    %p211 = scmp.ne.s32.totalorder %s202, %s203
    %p212 = scmp.eq.s32.totalorder %s24, 0
    %p213 = por %p211, %p212
    %p214 = scmp.ne.s32.totalorder %s202, %s203
    %p215 = scmp.eq.s32.totalorder %s25, 1
    %p216 = por %p214, %p215
    %p218 = scmp.ne.s32.totalorder %s203, %s217
    %p219 = scmp.eq.s32.totalorder %s25, 0
    %p220 = por %p218, %p219
    %s222 = sadd.s32 %s221, 1
    %p225 = scmp.eq.s32.totalorder %s19, 1
    %p226 = scmp.ne.s32.totalorder %s221, %s223
    %p227 = scmp.eq.s32.totalorder %s19, 0
    %p228 = por %p226, %p227
    %p229 = scmp.ne.s32.totalorder %s221, %s223
    %p230 = scmp.eq.s32.totalorder %s24, 1
    %p231 = por %p229, %p230
    %p232 = scmp.ne.s32.totalorder %s223, %s224
    %p233 = scmp.eq.s32.totalorder %s24, 0
    %p234 = por %p232, %p233
    %p235 = scmp.ne.s32.totalorder %s223, %s224
    %p236 = scmp.eq.s32.totalorder %s25, 1
    %p237 = por %p235, %p236
    %p239 = scmp.ne.s32.totalorder %s224, %s238
    %p240 = scmp.eq.s32.totalorder %s25, 0
    %p241 = por %p239, %p240
    %s243 = sadd.s32 %s242, 1
    %p246 = scmp.eq.s32.totalorder %s19, 1
    %p247 = scmp.ne.s32.totalorder %s242, %s244
    %p248 = scmp.eq.s32.totalorder %s19, 0
    %p249 = por %p247, %p248
    %p250 = scmp.ne.s32.totalorder %s242, %s244
    %p251 = scmp.eq.s32.totalorder %s24, 1
    %p252 = por %p250, %p251
    %p253 = scmp.ne.s32.totalorder %s244, %s245
    %p254 = scmp.eq.s32.totalorder %s24, 0
    %p255 = por %p253, %p254
    %p256 = scmp.ne.s32.totalorder %s244, %s245
    %p257 = scmp.eq.s32.totalorder %s25, 1
    %p258 = por %p256, %p257
    %p260 = scmp.ne.s32.totalorder %s245, %s259
    %p261 = scmp.eq.s32.totalorder %s25, 0
    %p262 = por %p260, %p261
    %s264 = sadd.s32 %s263, 1
    %p267 = scmp.eq.s32.totalorder %s19, 1
    %p268 = scmp.ne.s32.totalorder %s263, %s265
    %p269 = scmp.eq.s32.totalorder %s19, 0
    %p270 = por %p268, %p269
    %p271 = scmp.ne.s32.totalorder %s263, %s265
    %p272 = scmp.eq.s32.totalorder %s24, 1
    %p273 = por %p271, %p272
    %p274 = scmp.ne.s32.totalorder %s265, %s266
    %p275 = scmp.eq.s32.totalorder %s24, 0
    %p276 = por %p274, %p275
    %p277 = scmp.ne.s32.totalorder %s265, %s266
    %p278 = scmp.eq.s32.totalorder %s25, 1
    %p279 = por %p277, %p278
    %p281 = scmp.ne.s32.totalorder %s266, %s280
    %p282 = scmp.eq.s32.totalorder %s25, 0
    %p283 = por %p281, %p282
    %s285 = sadd.s32 %s284, 1
    %p288 = scmp.eq.s32.totalorder %s19, 1
    %p289 = scmp.ne.s32.totalorder %s284, %s286
    %p290 = scmp.eq.s32.totalorder %s19, 0
    %p291 = por %p289, %p290
    %p292 = scmp.ne.s32.totalorder %s284, %s286
    %p293 = scmp.eq.s32.totalorder %s24, 1
    %p294 = por %p292, %p293
    %p295 = scmp.ne.s32.totalorder %s286, %s287
    %p296 = scmp.eq.s32.totalorder %s24, 0
    %p297 = por %p295, %p296
    %p298 = scmp.ne.s32.totalorder %s286, %s287
    %p299 = scmp.eq.s32.totalorder %s25, 1
    %p300 = por %p298, %p299
    %p302 = scmp.ne.s32.totalorder %s287, %s301
    %p303 = scmp.eq.s32.totalorder %s25, 0
    %p304 = por %p302, %p303
    %s305 = ssub.s32 %s19, %s26
    %p306 = scmp.eq.s32.totalorder %s305, 0
    %s308 = sadd.s32 %s307, 1
    %s309 = scalar_select %p306, %s307, %s308
    %p312 = pneg %p306
    %p313 = scmp.eq.s32.totalorder %s19, 1
    %p314 = por %p312, %p313
    %p315 = scmp.ne.s32.totalorder %s307, %s310
    %p316 = scmp.eq.s32.totalorder %s19, 0
    %p317 = por %p315, %p316
    %p318 = scmp.ne.s32.totalorder %s307, %s310
    %p319 = scmp.eq.s32.totalorder %s24, 1
    %p320 = por %p318, %p319
    %p321 = scmp.ne.s32.totalorder %s310, %s311
    %p322 = scmp.eq.s32.totalorder %s24, 0
    %p323 = por %p321, %p322
    %p324 = scmp.ne.s32.totalorder %s310, %s311
    %p325 = scmp.eq.s32.totalorder %s25, 1
    %p326 = por %p324, %p325
    %p328 = scmp.ne.s32.totalorder %s311, %s327
    %p329 = scmp.eq.s32.totalorder %s25, 0
    %p330 = por %p328, %p329
    %p331 = scmp.le.s32.totalorder 1, %s19
    %p332 = scmp.lt.s32.totalorder %s19, 3
    %p333 = pnand %p331, %p332
    %p334 = pneg %p333
    // Predicated region
    $region9: #{vit_forward.5} parent=5 // pred_check
      _
    $region10: #{vit_forward.5} parent=5 // pred_check_branch
      %336 = sbr.rel (%p333) target = $region12
    $region11: #{vit_forward.5} parent=5 // pred_region
      %s337 = ssub.s32 %s19, 1
      // Predicated region
      $region13: #{vit_forward.5} parent=11 // pred_check
        %p338 = pneg %p66
      $region14: #{vit_forward.5} parent=11 // pred_check_branch
        %340 = sbr.rel (%p338) target = $region16
      $region15: #{vit_forward.5} parent=11 // pred_region
        _
      $region16: #{vit_forward.5} parent=11 // pred_fallthru
        _
      // Predicated region
      $region17: #{vit_forward.5} parent=11 // pred_check
        %p341 = pneg %p87
      $region18: #{vit_forward.5} parent=11 // pred_check_branch
        %343 = sbr.rel (%p341) target = $region20
      $region19: #{vit_forward.5} parent=11 // pred_region
        _
      $region20: #{vit_forward.5} parent=11 // pred_fallthru
        _
      // Predicated region
      $region21: #{vit_forward.5} parent=11 // pred_check
        %p344 = pneg %p108
      $region22: #{vit_forward.5} parent=11 // pred_check_branch
        %346 = sbr.rel (%p344) target = $region24
      $region23: #{vit_forward.5} parent=11 // pred_region
        _
      $region24: #{vit_forward.5} parent=11 // pred_fallthru
        _
      // Predicated region
      $region25: #{vit_forward.5} parent=11 // pred_check
        %p347 = pneg %p129
      $region26: #{vit_forward.5} parent=11 // pred_check_branch
        %349 = sbr.rel (%p347) target = $region28
      $region27: #{vit_forward.5} parent=11 // pred_region
        _
      $region28: #{vit_forward.5} parent=11 // pred_fallthru
        _
      // Predicated region
      $region29: #{vit_forward.5} parent=11 // pred_check
        %p350 = pneg %p150
      $region30: #{vit_forward.5} parent=11 // pred_check_branch
        %352 = sbr.rel (%p350) target = $region32
      $region31: #{vit_forward.5} parent=11 // pred_region
        _
      $region32: #{vit_forward.5} parent=11 // pred_fallthru
        _
      // Predicated region
      $region33: #{vit_forward.5} parent=11 // pred_check
        %p353 = pneg %p171
      $region34: #{vit_forward.5} parent=11 // pred_check_branch
        %355 = sbr.rel (%p353) target = $region36
      $region35: #{vit_forward.5} parent=11 // pred_region
        _
      $region36: #{vit_forward.5} parent=11 // pred_fallthru
        _
      // Predicated region
      $region37: #{vit_forward.5} parent=11 // pred_check
        %p356 = pneg %p192
      $region38: #{vit_forward.5} parent=11 // pred_check_branch
        %358 = sbr.rel (%p356) target = $region40
      $region39: #{vit_forward.5} parent=11 // pred_region
        _
      $region40: #{vit_forward.5} parent=11 // pred_fallthru
        _
      // Predicated region
      $region41: #{vit_forward.5} parent=11 // pred_check
        %p359 = pneg %p213
      $region42: #{vit_forward.5} parent=11 // pred_check_branch
        %361 = sbr.rel (%p359) target = $region44
      $region43: #{vit_forward.5} parent=11 // pred_region
        _
      $region44: #{vit_forward.5} parent=11 // pred_fallthru
        _
      // Predicated region
      $region45: #{vit_forward.5} parent=11 // pred_check
        %p362 = pneg %p234
      $region46: #{vit_forward.5} parent=11 // pred_check_branch
        %364 = sbr.rel (%p362) target = $region48
      $region47: #{vit_forward.5} parent=11 // pred_region
        _
      $region48: #{vit_forward.5} parent=11 // pred_fallthru
        _
      // Predicated region
      $region49: #{vit_forward.5} parent=11 // pred_check
        %p365 = pneg %p255
      $region50: #{vit_forward.5} parent=11 // pred_check_branch
        %367 = sbr.rel (%p365) target = $region52
      $region51: #{vit_forward.5} parent=11 // pred_region
        _
      $region52: #{vit_forward.5} parent=11 // pred_fallthru
        _
      // Predicated region
      $region53: #{vit_forward.5} parent=11 // pred_check
        %p368 = pneg %p276
      $region54: #{vit_forward.5} parent=11 // pred_check_branch
        %370 = sbr.rel (%p368) target = $region56
      $region55: #{vit_forward.5} parent=11 // pred_region
        _
      $region56: #{vit_forward.5} parent=11 // pred_fallthru
        _
      // Predicated region
      $region57: #{vit_forward.5} parent=11 // pred_check
        %p371 = pneg %p297
      $region58: #{vit_forward.5} parent=11 // pred_check_branch
        %373 = sbr.rel (%p371) target = $region60
      $region59: #{vit_forward.5} parent=11 // pred_region
        _
      $region60: #{vit_forward.5} parent=11 // pred_fallthru
        _
    $region12: #{vit_forward.5} parent=5 // pred_fallthru
      _
    %p374 = scmp.lt.s32.totalorder %s19, 2
    // Predicated region
    $region61: #{vit_forward.5} parent=5 // pred_check
      %p375 = pneg %p374
    $region62: #{vit_forward.5} parent=5 // pred_check_branch
      %377 = sbr.rel (%p375) target = $region64
    $region63: #{vit_forward.5} parent=5 // pred_region
      // Predicated region
      $region65: #{vit_forward.5} parent=63 // pred_check
        %p378 = pneg %p39
      $region66: #{vit_forward.5} parent=63 // pred_check_branch
        %380 = sbr.rel (%p378) target = $region68
      $region67: #{vit_forward.5} parent=63 // pred_region
        %p381 = scmp.lt.s32.totalorder %s19, 1
        %s382 = scalar_select %p381, %s19, 1
        %s383 = smul.addr %s382, 8
        %s384 = scalar_lea.vmem %s0, %s383
      $region68: #{vit_forward.5} parent=63 // pred_fallthru
        _
    $region64: #{vit_forward.5} parent=5 // pred_fallthru
      _
    %p385 = scmp.le.s32.totalorder 1, %s19
    %p386 = scmp.lt.s32.totalorder %s19, 3
    %p387 = pnand %p385, %p386
    %p388 = pneg %p387
    // Predicated region
    $region69: #{vit_forward.5} parent=5 // pred_check
      _
    $region70: #{vit_forward.5} parent=5 // pred_check_branch
      %390 = sbr.rel (%p387) target = $region72
    $region71: #{vit_forward.5} parent=5 // pred_region
      %s391 = ssub.s32 %s19, 1
      %p392 = scmp.lt.s32.totalorder %s24, 1
      %s393 = scalar_select %p392, %s24, 1
      %s394 = smul.addr %s393, 8
      %s395 = scalar_lea.vmem %s0, %s394
      %p396 = pneg %p45
      %p397 = pneg %p42
      %p398 = pneg %p66
      %p399 = pneg %p63
      %p400 = pneg %p87
      %p401 = pneg %p84
      %p402 = pneg %p108
      %p403 = pneg %p105
      %p404 = pneg %p129
      %p405 = pneg %p126
      %p406 = pneg %p150
      %p407 = pneg %p147
      %p408 = pneg %p171
      %p409 = pneg %p168
      %p410 = pneg %p192
      %p411 = pneg %p189
      %p412 = pneg %p213
      %p413 = pneg %p210
      %p414 = pneg %p234
      %p415 = pneg %p231
      %p416 = pneg %p255
      %p417 = pneg %p252
      %p418 = pneg %p276
      %p419 = pneg %p273
      %p420 = pneg %p297
      %p421 = pneg %p294
      %p422 = pneg %p323
      %p423 = pneg %p320
      %p424 = scmp.lt.s32.totalorder %s24, 1
      %s425 = scalar_select %p424, %s24, 1
      %s426 = smul.addr %s425, 8
      %s427 = scalar_lea.vmem %s13, %s426
      %p428 = scmp.lt.s32.totalorder %s24, 1
      %s429 = scalar_select %p428, %s24, 1
      %s430 = smul.addr %s429, 8
      %s431 = scalar_lea.vmem %s0, %s430
      %p432 = scmp.lt.s32.totalorder %s24, 1
      %s433 = scalar_select %p432, %s24, 1
      %s434 = smul.addr %s433, 8
      %s435 = scalar_lea.vmem %s13, %s434
      %v437 = vld [vmem:[%s431] sm:$0xff]
      %v438 = vld [vmem:[%s1] sm:$0x1]
      %v439 = vld [vmem:[%s2] sm:$0x1]
      %440 = vadd.xlane.f32.xlu0 %v437
      %v441 = vpop.xlane.xlu0 %440
      %v442 = vrcp.pop 128.0
      %v443 = vmul.f32 %v441, %v442
      %v444 = vsub.f32 %v437, %v443
      %v445 = vmul.f32 %v444, %v444
      %446 = vadd.xlane.f32.xlu0 %v445
      %v447 = vpop.xlane.xlu0 %446
      %v448 = vmul.f32 %v447, %v442
      %v449 = vadd.f32 %v448, 1e-06
      %v450 = vrsqrt.pop %v449
      %v451 = vmul.f32 %v444, %v450
      %v453 = vlaneseq
      %v454 = vshrl.u32 %v453, 7
      %v455 = vsub.s32 0, %v454
      %v456 = vrot.slane %v438, %v455
      %v458 = vmul.f32 %v451, %v456
      %v460 = vlaneseq
      %v461 = vshrl.u32 %v460, 7
      %v462 = vsub.s32 0, %v461
      %v463 = vrot.slane %v439, %v462
      %v465 = vadd.f32 %v458, %v463
      %v466 = vpack.c.bf16 %v465, %v465
      %v467 = vld [vmem:[%s3] sm:$0xff]
      %v468 = vld [vmem:[%s3 + $0x8] sm:$0xf]
      %v469 = vld [vmem:[%s3 + $0xc] sm:$0xff]
      %v470 = vld [vmem:[%s3 + $0x14] sm:$0xf]
      %v471 = vld [vmem:[%s3 + $0x18] sm:$0xff]
      %v472 = vld [vmem:[%s3 + $0x20] sm:$0xf]
      %v473 = vld [vmem:[%s3 + $0x24] sm:$0xff]
      %v474 = vld [vmem:[%s3 + $0x2c] sm:$0xf]
      %v475 = vld [vmem:[%s3 + $0x30] sm:$0xff]
      %v476 = vld [vmem:[%s3 + $0x38] sm:$0xf]
      %v477 = vld [vmem:[%s3 + $0x3c] sm:$0xff]
      %v478 = vld [vmem:[%s3 + $0x44] sm:$0xf]
      %v479 = vld [vmem:[%s3 + $0x48] sm:$0xff]
      %v480 = vld [vmem:[%s3 + $0x50] sm:$0xf]
      %v481 = vld [vmem:[%s3 + $0x54] sm:$0xff]
      %v482 = vld [vmem:[%s3 + $0x5c] sm:$0xf]
      %v483 = vld [vmem:[%s3 + $0x60] sm:$0xff]
      %v484 = vld [vmem:[%s3 + $0x68] sm:$0xf]
      %v485 = vld [vmem:[%s3 + $0x6c] sm:$0xff]
      %v486 = vld [vmem:[%s3 + $0x74] sm:$0xf]
      %v487 = vld [vmem:[%s3 + $0x78] sm:$0xff]
      %v488 = vld [vmem:[%s3 + $0x80] sm:$0xf]
      %v489 = vld [vmem:[%s3 + $0x84] sm:$0xff]
      %v490 = vld [vmem:[%s3 + $0x8c] sm:$0xf]
      %v491 = vld [vmem:[%s3 + $0x90] sm:$0xff]
      %v492 = vld [vmem:[%s3 + $0x98] sm:$0xf]
      %v493 = vld [vmem:[%s3 + $0x9c] sm:$0xff]
      %v494 = vld [vmem:[%s3 + $0xa4] sm:$0xf]
      %v495 = vld [vmem:[%s3 + $0xa8] sm:$0xff]
      %v496 = vld [vmem:[%s3 + $0xb0] sm:$0xf]
      %v497 = vld [vmem:[%s3 + $0xb4] sm:$0xff]
      %v498 = vld [vmem:[%s3 + $0xbc] sm:$0xf]
      %v499 = vld [vmem:[%s4] sm:$0x7]
      %v501 = vlaneseq
      %v502 = vshrl.u32 %v501, 7
      %v503 = vsub.s32 0, %v502
      %v504 = vrot.slane %v499, %v503
      %v505 = vlaneseq
      %v506 = vshrl.u32 %v505, 7
      %v507 = vsub.s32 1, %v506
      %v508 = vrot.slane %v499, %v507
      %v509 = vlaneseq
      %v510 = vshrl.u32 %v509, 7
      %v511 = vsub.s32 2, %v510
      %v512 = vrot.slane %v499, %v511
      %v548 = vunpack.c.l.b16 %v467
      %v549 = vunpack.c.h.b16 %v467
      %v550 = vunpack.c.l.b16 %v468
      %v551 = vunpack.c.l.b16 %v469
      %v552 = vunpack.c.h.b16 %v469
      %v553 = vunpack.c.l.b16 %v470
      %v554 = vunpack.c.l.b16 %v471
      %v555 = vunpack.c.h.b16 %v471
      %v556 = vunpack.c.l.b16 %v472
      %v557 = vunpack.c.l.b16 %v473
      %v558 = vunpack.c.h.b16 %v473
      %v559 = vunpack.c.l.b16 %v474
      %v560 = vunpack.c.l.b16 %v475
      %v561 = vunpack.c.h.b16 %v475
      %v562 = vunpack.c.l.b16 %v476
      %v563 = vunpack.c.l.b16 %v477
      %v564 = vunpack.c.h.b16 %v477
      %v565 = vunpack.c.l.b16 %v478
      %v566 = vunpack.c.l.b16 %v479
      %v567 = vunpack.c.h.b16 %v479
      %v568 = vunpack.c.l.b16 %v480
      %v569 = vunpack.c.l.b16 %v481
      %v570 = vunpack.c.h.b16 %v481
      %v571 = vunpack.c.l.b16 %v482
      %v572 = vunpack.c.l.b16 %v483
      %v573 = vunpack.c.h.b16 %v483
      %v574 = vunpack.c.l.b16 %v484
      %v575 = vunpack.c.l.b16 %v485
      %v576 = vunpack.c.h.b16 %v485
      %v577 = vunpack.c.l.b16 %v486
      %v578 = vunpack.c.l.b16 %v487
      %v579 = vunpack.c.h.b16 %v487
      %v580 = vunpack.c.l.b16 %v488
      %v581 = vunpack.c.l.b16 %v489
      %v582 = vunpack.c.h.b16 %v489
      %v583 = vunpack.c.l.b16 %v490
      %v584 = vunpack.c.l.b16 %v491
      %v585 = vunpack.c.h.b16 %v491
      %v586 = vunpack.c.l.b16 %v492
      %v587 = vunpack.c.l.b16 %v493
      %v588 = vunpack.c.h.b16 %v493
      %v589 = vunpack.c.l.b16 %v494
      %v590 = vunpack.c.l.b16 %v495
      %v591 = vunpack.c.h.b16 %v495
      %v592 = vunpack.c.l.b16 %v496
      %v593 = vunpack.c.l.b16 %v497
      %v594 = vunpack.c.h.b16 %v497
      %v595 = vunpack.c.l.b16 %v498
      %v596 = vpack.c.b16 %v551, %v548
      %v597 = vpack.c.b16 %v552, %v549
      %v598 = vpack.c.b16 %v553, %v550
      %v599 = vpack.c.b16 %v557, %v554
      %v600 = vpack.c.b16 %v558, %v555
      %v601 = vpack.c.b16 %v559, %v556
      %v602 = vpack.c.b16 %v563, %v560
      %v603 = vpack.c.b16 %v564, %v561
      %v604 = vpack.c.b16 %v565, %v562
      %v605 = vpack.c.b16 %v569, %v566
      %v606 = vpack.c.b16 %v570, %v567
      %v607 = vpack.c.b16 %v571, %v568
      %v608 = vpack.c.b16 %v575, %v572
      %v609 = vpack.c.b16 %v576, %v573
      %v610 = vpack.c.b16 %v577, %v574
      %v611 = vpack.c.b16 %v581, %v578
      %v612 = vpack.c.b16 %v582, %v579
      %v613 = vpack.c.b16 %v583, %v580
      %v614 = vpack.c.b16 %v587, %v584
      %v615 = vpack.c.b16 %v588, %v585
      %v616 = vpack.c.b16 %v589, %v586
      %v617 = vpack.c.b16 %v593, %v590
      %v618 = vpack.c.b16 %v594, %v591
      %v619 = vpack.c.b16 %v595, %v592
      %644 = vmatprep.subr.bf16.mxu0 %v618
      %645 = vmatpush1.bf16.msra.mxu0 %v617
      %646 = vmatprep.subr.bf16.mxu0 %v615
      %647 = vmatpush1.bf16.msra.mxu0 %v614
      %648 = vmatprep.subr.bf16.mxu0 %v612
      %649 = vmatpush1.bf16.msra.mxu0 %v611
      %650 = vmatprep.subr.bf16.mxu0 %v609
      %651 = vmatpush1.bf16.msra.mxu0 %v608
      %652 = vmatprep.subr.bf16.mxu0 %v606
      %653 = vmatpush1.bf16.msra.mxu0 %v605
      %654 = vmatprep.subr.bf16.mxu0 %v603
      %655 = vmatpush1.bf16.msra.mxu0 %v602
      %656 = vmatprep.subr.bf16.mxu0 %v600
      %657 = vmatpush1.bf16.msra.mxu0 %v599
      %658 = vmatprep.subr.bf16.mxu0 %v597
      %659 = vmatpush1.bf16.msra.mxu0 %v596
      %660 = vmatprep.subr.bf16.mxu0 0
      %661 = vmatpush2.bf16.msra.mxu0 0
      %662 = vmatprep.subr.bf16.mxu0 0
      %663 = vmatpush2.bf16.msra.mxu0 0
      %664 = vmatprep.subr.bf16.mxu0 0
      %665 = vmatpush2.bf16.msra.mxu0 0
      %666 = vmatprep.subr.bf16.mxu0 0
      %667 = vmatpush2.bf16.msra.mxu0 0
      %668 = vmatprep.subr.bf16.mxu0 0
      %669 = vmatpush2.bf16.msra.mxu0 0
      %670 = vmatprep.subr.bf16.mxu0 0
      %671 = vmatpush2.bf16.msra.mxu0 0
      %672 = vmatprep.subr.bf16.mxu0 0
      %673 = vmatpush2.bf16.msra.mxu0 0
      %674 = vmatprep.subr.bf16.mxu0 0
      %675 = vmatpush2.bf16.msra.mxu0 0
      %676 = vmatprep.mubr.bf16.mxu0 0
      %677 = vmatmul.mubr.bf16.gmra.mxu0 %v466
      %v678 = vpop.f32.mrf.mxu0
      %v679 = vadd.f32 %v504, %v678
      %v680 = vpop.f32.mrf.mxu0
      %v681 = vadd.f32 %v508, %v680
      %v682 = vpop.f32.mrf.mxu0
      %v683 = vpop.f32.mrf.mxu0
      %684 = vdwg.mxu0
      %685 = vmatprep.subr.bf16.mxu0 0
      %686 = vmatpush1.bf16.msra.mxu0 %v619
      %687 = vmatprep.subr.bf16.mxu0 0
      %688 = vmatpush1.bf16.msra.mxu0 %v616
      %689 = vmatprep.subr.bf16.mxu0 0
      %690 = vmatpush1.bf16.msra.mxu0 %v613
      %691 = vmatprep.subr.bf16.mxu0 0
      %692 = vmatpush1.bf16.msra.mxu0 %v610
      %693 = vmatprep.subr.bf16.mxu0 0
      %694 = vmatpush1.bf16.msra.mxu0 %v607
      %695 = vmatprep.subr.bf16.mxu0 0
      %696 = vmatpush1.bf16.msra.mxu0 %v604
      %697 = vmatprep.subr.bf16.mxu0 0
      %698 = vmatpush1.bf16.msra.mxu0 %v601
      %699 = vmatprep.subr.bf16.mxu0 0
      %700 = vmatpush1.bf16.msra.mxu0 %v598
      %701 = vmatprep.subr.bf16.mxu0 0
      %702 = vmatpush2.bf16.msra.mxu0 0
      %703 = vmatprep.subr.bf16.mxu0 0
      %704 = vmatpush2.bf16.msra.mxu0 0
      %705 = vmatprep.subr.bf16.mxu0 0
      %706 = vmatpush2.bf16.msra.mxu0 0
      %707 = vmatprep.subr.bf16.mxu0 0
      %708 = vmatpush2.bf16.msra.mxu0 0
      %709 = vmatprep.subr.bf16.mxu0 0
      %710 = vmatpush2.bf16.msra.mxu0 0
      %711 = vmatprep.subr.bf16.mxu0 0
      %712 = vmatpush2.bf16.msra.mxu0 0
      %713 = vmatprep.subr.bf16.mxu0 0
      %714 = vmatpush2.bf16.msra.mxu0 0
      %715 = vmatprep.subr.bf16.mxu0 0
      %716 = vmatpush2.bf16.msra.mxu0 0
      %717 = vmatprep.mubr.bf16.mxu0 0
      %718 = vmatmul.mubr.bf16.gmra.mxu0 %v466
      %v719 = vpop.f32.mrf.mxu0
      %v720 = vadd.f32 %v512, %v719
      %v721 = vpop.f32.mrf.mxu0
      %v722 = vpop.f32.mrf.mxu0
      %v723 = vpop.f32.mrf.mxu0
      %724 = vdwg.mxu0
      %v725 = vpack.c.bf16 %v679, %v679
      %v726 = vpack.c.bf16 %v681, %v681
      %v727 = vpack.c.bf16 %v720, %v720
      %729 = vrot.lane.b32.xlu0 %v725, 96
      %v730 = vpop.permute.xlu0 %729
      %731 = vrot.lane.b32.xlu0 %v725, 64
      %v732 = vpop.permute.xlu0 %731
      %733 = vrot.lane.b32.xlu0 %v725, 32
      %v734 = vpop.permute.xlu0 %733
      %v736 = vunpack.c.l.s4 1983009808
      %v737 = vunpack.c.0.s8 %v736
      %v738 = vlaneseq
      %v739 = vshrl.u32 %v738, 7
      %v740 = vsub.s32 %v737, %v739
      %v741 = vrot.slane %v725, %v740
      %v744 = vunpack.c.l.s4 1983009808
      %v745 = vunpack.c.0.s8 %v744
      %v746 = vlaneseq
      %v747 = vshrl.u32 %v746, 7
      %v748 = vsub.s32 %v745, %v747
      %v749 = vrot.slane %v732, %v748
      %v750 = vcombine.low %v741, %v749
      %v751 = vcombine.high %v741, %v749
      %v753 = vunpack.c.l.s4 1934713408
      %v754 = vunpack.c.0.s8 %v753
      %v755 = vlaneseq
      %v756 = vshrl.u32 %v755, 7
      %v757 = vsub.s32 %v754, %v756
      %v758 = vrot.slane %v750, %v757
      %v760 = vunpack.c.l.s4 1934713408
      %v761 = vunpack.c.0.s8 %v760
      %v762 = vlaneseq
      %v763 = vshrl.u32 %v762, 7
      %v764 = vsub.s32 %v761, %v763
      %v765 = vrot.slane %v751, %v764
      %v766 = vcombine.high %v758, 0
      %v767 = vcombine.high %v765, 0
      %v770 = vunpack.c.l.s4 1983009808
      %v771 = vunpack.c.0.s8 %v770
      %v772 = vlaneseq
      %v773 = vshrl.u32 %v772, 7
      %v774 = vsub.s32 %v771, %v773
      %v775 = vrot.slane %v730, %v774
      %v778 = vunpack.c.l.s4 1983009808
      %v779 = vunpack.c.0.s8 %v778
      %v780 = vlaneseq
      %v781 = vshrl.u32 %v780, 7
      %v782 = vsub.s32 %v779, %v781
      %v783 = vrot.slane %v734, %v782
      %v784 = vcombine.low %v775, %v783
      %v785 = vcombine.high %v775, %v783
      %v787 = vunpack.c.l.s4 1934713408
      %v788 = vunpack.c.0.s8 %v787
      %v789 = vlaneseq
      %v790 = vshrl.u32 %v789, 7
      %v791 = vsub.s32 %v788, %v790
      %v792 = vrot.slane %v784, %v791
      %v794 = vunpack.c.l.s4 1934713408
      %v795 = vunpack.c.0.s8 %v794
      %v796 = vlaneseq
      %v797 = vshrl.u32 %v796, 7
      %v798 = vsub.s32 %v795, %v797
      %v799 = vrot.slane %v785, %v798
      %v800 = vcombine.high %v792, 0
      %v801 = vcombine.high %v799, 0
      %v804 = vpack.i.b16 %v792, %v758
      %v806 = vshrl.u32 %v758, 16
      %v807 = vshrl.u32 %v792, 16
      %v808 = vpack.i.b16 %v807, %v806
      %v812 = vpack.i.b16 %v800, %v766
      %v814 = vshrl.u32 %v766, 16
      %v815 = vshrl.u32 %v800, 16
      %v816 = vpack.i.b16 %v815, %v814
      %v820 = vpack.i.b16 %v799, %v765
      %v822 = vshrl.u32 %v765, 16
      %v823 = vshrl.u32 %v799, 16
      %v824 = vpack.i.b16 %v823, %v822
      %v828 = vpack.i.b16 %v801, %v767
      %v830 = vshrl.u32 %v767, 16
      %v831 = vshrl.u32 %v801, 16
      %v832 = vpack.i.b16 %v831, %v830
      %v834 = vcombine.low %v804, %v820
      %v836 = vunpack.c.l.s4 1983009808
      %v837 = vunpack.c.0.s8 %v836
      %v838 = vlaneseq
      %v839 = vshrl.u32 %v838, 7
      %v840 = vsub.s32 %v837, %v839
      %v841 = vrot.slane %v834, %v840
      %v842 = vcombine.low %v812, %v828
      %v844 = vunpack.c.l.s4 1983009808
      %v845 = vunpack.c.0.s8 %v844
      %v846 = vlaneseq
      %v847 = vshrl.u32 %v846, 7
      %v848 = vsub.s32 %v845, %v847
      %v849 = vrot.slane %v842, %v848
      %v850 = vcombine.low %v841, %v849
      %v852 = vunpack.c.l.s4 1934713408
      %v853 = vunpack.c.0.s8 %v852
      %v854 = vlaneseq
      %v855 = vshrl.u32 %v854, 7
      %v856 = vsub.s32 %v853, %v855
      %v857 = vrot.slane %v850, %v856
      %v858 = vcombine.high %v857, 0
      %v859 = vcombine.low %v808, %v824
      %v861 = vunpack.c.l.s4 1983009808
      %v862 = vunpack.c.0.s8 %v861
      %v863 = vlaneseq
      %v864 = vshrl.u32 %v863, 7
      %v865 = vsub.s32 %v862, %v864
      %v866 = vrot.slane %v859, %v865
      %v867 = vcombine.low %v816, %v832
      %v869 = vunpack.c.l.s4 1983009808
      %v870 = vunpack.c.0.s8 %v869
      %v871 = vlaneseq
      %v872 = vshrl.u32 %v871, 7
      %v873 = vsub.s32 %v870, %v872
      %v874 = vrot.slane %v867, %v873
      %v875 = vcombine.low %v866, %v874
      %v877 = vunpack.c.l.s4 1934713408
      %v878 = vunpack.c.0.s8 %v877
      %v879 = vlaneseq
      %v880 = vshrl.u32 %v879, 7
      %v881 = vsub.s32 %v878, %v880
      %v882 = vrot.slane %v875, %v881
      %v883 = vcombine.high %v882, 0
      %v886 = vpack.i.b16 %v882, %v857
      %v887 = vshrl.u32 %v857, 16
      %v888 = vshrl.u32 %v882, 16
      %v889 = vpack.i.b16 %v888, %v887
      %v892 = vpack.i.b16 %v883, %v858
      %v893 = vshrl.u32 %v858, 16
      %v894 = vshrl.u32 %v883, 16
      %v895 = vpack.i.b16 %v894, %v893
      %897 = vrot.lane.b32.xlu0 %v726, 96
      %v898 = vpop.permute.xlu0 %897
      %899 = vrot.lane.b32.xlu0 %v726, 64
      %v900 = vpop.permute.xlu0 %899
      %901 = vrot.lane.b32.xlu0 %v726, 32
      %v902 = vpop.permute.xlu0 %901
      %v904 = vunpack.c.l.s4 1983009808
      %v905 = vunpack.c.0.s8 %v904
      %v906 = vlaneseq
      %v907 = vshrl.u32 %v906, 7
      %v908 = vsub.s32 %v905, %v907
      %v909 = vrot.slane %v726, %v908
      %v912 = vunpack.c.l.s4 1983009808
      %v913 = vunpack.c.0.s8 %v912
      %v914 = vlaneseq
      %v915 = vshrl.u32 %v914, 7
      %v916 = vsub.s32 %v913, %v915
      %v917 = vrot.slane %v900, %v916
      %v918 = vcombine.low %v909, %v917
      %v919 = vcombine.high %v909, %v917
      %v921 = vunpack.c.l.s4 1934713408
      %v922 = vunpack.c.0.s8 %v921
      %v923 = vlaneseq
      %v924 = vshrl.u32 %v923, 7
      %v925 = vsub.s32 %v922, %v924
      %v926 = vrot.slane %v918, %v925
      %v928 = vunpack.c.l.s4 1934713408
      %v929 = vunpack.c.0.s8 %v928
      %v930 = vlaneseq
      %v931 = vshrl.u32 %v930, 7
      %v932 = vsub.s32 %v929, %v931
      %v933 = vrot.slane %v919, %v932
      %v934 = vcombine.high %v926, 0
      %v935 = vcombine.high %v933, 0
      %v938 = vunpack.c.l.s4 1983009808
      %v939 = vunpack.c.0.s8 %v938
      %v940 = vlaneseq
      %v941 = vshrl.u32 %v940, 7
      %v942 = vsub.s32 %v939, %v941
      %v943 = vrot.slane %v898, %v942
      %v946 = vunpack.c.l.s4 1983009808
      %v947 = vunpack.c.0.s8 %v946
      %v948 = vlaneseq
      %v949 = vshrl.u32 %v948, 7
      %v950 = vsub.s32 %v947, %v949
      %v951 = vrot.slane %v902, %v950
      %v952 = vcombine.low %v943, %v951
      %v953 = vcombine.high %v943, %v951
      %v955 = vunpack.c.l.s4 1934713408
      %v956 = vunpack.c.0.s8 %v955
      %v957 = vlaneseq
      %v958 = vshrl.u32 %v957, 7
      %v959 = vsub.s32 %v956, %v958
      %v960 = vrot.slane %v952, %v959
      %v962 = vunpack.c.l.s4 1934713408
      %v963 = vunpack.c.0.s8 %v962
      %v964 = vlaneseq
      %v965 = vshrl.u32 %v964, 7
      %v966 = vsub.s32 %v963, %v965
      %v967 = vrot.slane %v953, %v966
      %v968 = vcombine.high %v960, 0
      %v969 = vcombine.high %v967, 0
      %v972 = vpack.i.b16 %v960, %v926
      %v974 = vshrl.u32 %v926, 16
      %v975 = vshrl.u32 %v960, 16
      %v976 = vpack.i.b16 %v975, %v974
      %v980 = vpack.i.b16 %v968, %v934
      %v982 = vshrl.u32 %v934, 16
      %v983 = vshrl.u32 %v968, 16
      %v984 = vpack.i.b16 %v983, %v982
      %v988 = vpack.i.b16 %v967, %v933
      %v990 = vshrl.u32 %v933, 16
      %v991 = vshrl.u32 %v967, 16
      %v992 = vpack.i.b16 %v991, %v990
      %v996 = vpack.i.b16 %v969, %v935
      %v998 = vshrl.u32 %v935, 16
      %v999 = vshrl.u32 %v969, 16
      %v1000 = vpack.i.b16 %v999, %v998
      %v1002 = vcombine.low %v972, %v988
      %v1004 = vunpack.c.l.s4 1983009808
      %v1005 = vunpack.c.0.s8 %v1004
      %v1006 = vlaneseq
      %v1007 = vshrl.u32 %v1006, 7
      %v1008 = vsub.s32 %v1005, %v1007
      %v1009 = vrot.slane %v1002, %v1008
      %v1010 = vcombine.low %v980, %v996
      %v1012 = vunpack.c.l.s4 1983009808
      %v1013 = vunpack.c.0.s8 %v1012
      %v1014 = vlaneseq
      %v1015 = vshrl.u32 %v1014, 7
      %v1016 = vsub.s32 %v1013, %v1015
      %v1017 = vrot.slane %v1010, %v1016
      %v1018 = vcombine.low %v1009, %v1017
      %v1020 = vunpack.c.l.s4 1934713408
      %v1021 = vunpack.c.0.s8 %v1020
      %v1022 = vlaneseq
      %v1023 = vshrl.u32 %v1022, 7
      %v1024 = vsub.s32 %v1021, %v1023
      %v1025 = vrot.slane %v1018, %v1024
      %v1026 = vcombine.high %v1025, 0
      %v1027 = vcombine.low %v976, %v992
      %v1029 = vunpack.c.l.s4 1983009808
      %v1030 = vunpack.c.0.s8 %v1029
      %v1031 = vlaneseq
      %v1032 = vshrl.u32 %v1031, 7
      %v1033 = vsub.s32 %v1030, %v1032
      %v1034 = vrot.slane %v1027, %v1033
      %v1035 = vcombine.low %v984, %v1000
      %v1037 = vunpack.c.l.s4 1983009808
      %v1038 = vunpack.c.0.s8 %v1037
      %v1039 = vlaneseq
      %v1040 = vshrl.u32 %v1039, 7
      %v1041 = vsub.s32 %v1038, %v1040
      %v1042 = vrot.slane %v1035, %v1041
      %v1043 = vcombine.low %v1034, %v1042
      %v1045 = vunpack.c.l.s4 1934713408
      %v1046 = vunpack.c.0.s8 %v1045
      %v1047 = vlaneseq
      %v1048 = vshrl.u32 %v1047, 7
      %v1049 = vsub.s32 %v1046, %v1048
      %v1050 = vrot.slane %v1043, %v1049
      %v1051 = vcombine.high %v1050, 0
      %v1054 = vpack.i.b16 %v1050, %v1025
      %v1055 = vshrl.u32 %v1025, 16
      %v1056 = vshrl.u32 %v1050, 16
      %v1057 = vpack.i.b16 %v1056, %v1055
      %v1060 = vpack.i.b16 %v1051, %v1026
      %v1061 = vshrl.u32 %v1026, 16
      %v1062 = vshrl.u32 %v1051, 16
      %v1063 = vpack.i.b16 %v1062, %v1061
      %1065 = vrot.lane.b32.xlu0 %v727, 96
      %v1066 = vpop.permute.xlu0 %1065
      %1067 = vrot.lane.b32.xlu0 %v727, 64
      %v1068 = vpop.permute.xlu0 %1067
      %1069 = vrot.lane.b32.xlu0 %v727, 32
      %v1070 = vpop.permute.xlu0 %1069
      %v1072 = vunpack.c.l.s4 1983009808
      %v1073 = vunpack.c.0.s8 %v1072
      %v1074 = vlaneseq
      %v1075 = vshrl.u32 %v1074, 7
      %v1076 = vsub.s32 %v1073, %v1075
      %v1077 = vrot.slane %v727, %v1076
      %v1080 = vunpack.c.l.s4 1983009808
      %v1081 = vunpack.c.0.s8 %v1080
      %v1082 = vlaneseq
      %v1083 = vshrl.u32 %v1082, 7
      %v1084 = vsub.s32 %v1081, %v1083
      %v1085 = vrot.slane %v1068, %v1084
      %v1086 = vcombine.low %v1077, %v1085
      %v1087 = vcombine.high %v1077, %v1085
      %v1089 = vunpack.c.l.s4 1934713408
      %v1090 = vunpack.c.0.s8 %v1089
      %v1091 = vlaneseq
      %v1092 = vshrl.u32 %v1091, 7
      %v1093 = vsub.s32 %v1090, %v1092
      %v1094 = vrot.slane %v1086, %v1093
      %v1096 = vunpack.c.l.s4 1934713408
      %v1097 = vunpack.c.0.s8 %v1096
      %v1098 = vlaneseq
      %v1099 = vshrl.u32 %v1098, 7
      %v1100 = vsub.s32 %v1097, %v1099
      %v1101 = vrot.slane %v1087, %v1100
      %v1102 = vcombine.high %v1094, 0
      %v1103 = vcombine.high %v1101, 0
      %v1106 = vunpack.c.l.s4 1983009808
      %v1107 = vunpack.c.0.s8 %v1106
      %v1108 = vlaneseq
      %v1109 = vshrl.u32 %v1108, 7
      %v1110 = vsub.s32 %v1107, %v1109
      %v1111 = vrot.slane %v1066, %v1110
      %v1114 = vunpack.c.l.s4 1983009808
      %v1115 = vunpack.c.0.s8 %v1114
      %v1116 = vlaneseq
      %v1117 = vshrl.u32 %v1116, 7
      %v1118 = vsub.s32 %v1115, %v1117
      %v1119 = vrot.slane %v1070, %v1118
      %v1120 = vcombine.low %v1111, %v1119
      %v1121 = vcombine.high %v1111, %v1119
      %v1123 = vunpack.c.l.s4 1934713408
      %v1124 = vunpack.c.0.s8 %v1123
      %v1125 = vlaneseq
      %v1126 = vshrl.u32 %v1125, 7
      %v1127 = vsub.s32 %v1124, %v1126
      %v1128 = vrot.slane %v1120, %v1127
      %v1130 = vunpack.c.l.s4 1934713408
      %v1131 = vunpack.c.0.s8 %v1130
      %v1132 = vlaneseq
      %v1133 = vshrl.u32 %v1132, 7
      %v1134 = vsub.s32 %v1131, %v1133
      %v1135 = vrot.slane %v1121, %v1134
      %v1136 = vcombine.high %v1128, 0
      %v1137 = vcombine.high %v1135, 0
      %v1140 = vpack.i.b16 %v1128, %v1094
      %v1142 = vshrl.u32 %v1094, 16
      %v1143 = vshrl.u32 %v1128, 16
      %v1144 = vpack.i.b16 %v1143, %v1142
      %v1148 = vpack.i.b16 %v1136, %v1102
      %v1150 = vshrl.u32 %v1102, 16
      %v1151 = vshrl.u32 %v1136, 16
      %v1152 = vpack.i.b16 %v1151, %v1150
      %v1156 = vpack.i.b16 %v1135, %v1101
      %v1158 = vshrl.u32 %v1101, 16
      %v1159 = vshrl.u32 %v1135, 16
      %v1160 = vpack.i.b16 %v1159, %v1158
      %v1164 = vpack.i.b16 %v1137, %v1103
      %v1166 = vshrl.u32 %v1103, 16
      %v1167 = vshrl.u32 %v1137, 16
      %v1168 = vpack.i.b16 %v1167, %v1166
      %v1170 = vcombine.low %v1140, %v1156
      %v1172 = vunpack.c.l.s4 1983009808
      %v1173 = vunpack.c.0.s8 %v1172
      %v1174 = vlaneseq
      %v1175 = vshrl.u32 %v1174, 7
      %v1176 = vsub.s32 %v1173, %v1175
      %v1177 = vrot.slane %v1170, %v1176
      %v1178 = vcombine.low %v1148, %v1164
      %v1180 = vunpack.c.l.s4 1983009808
      %v1181 = vunpack.c.0.s8 %v1180
      %v1182 = vlaneseq
      %v1183 = vshrl.u32 %v1182, 7
      %v1184 = vsub.s32 %v1181, %v1183
      %v1185 = vrot.slane %v1178, %v1184
      %v1186 = vcombine.low %v1177, %v1185
      %v1188 = vunpack.c.l.s4 1934713408
      %v1189 = vunpack.c.0.s8 %v1188
      %v1190 = vlaneseq
      %v1191 = vshrl.u32 %v1190, 7
      %v1192 = vsub.s32 %v1189, %v1191
      %v1193 = vrot.slane %v1186, %v1192
      %v1194 = vcombine.high %v1193, 0
      %v1195 = vcombine.low %v1144, %v1160
      %v1197 = vunpack.c.l.s4 1983009808
      %v1198 = vunpack.c.0.s8 %v1197
      %v1199 = vlaneseq
      %v1200 = vshrl.u32 %v1199, 7
      %v1201 = vsub.s32 %v1198, %v1200
      %v1202 = vrot.slane %v1195, %v1201
      %v1203 = vcombine.low %v1152, %v1168
      %v1205 = vunpack.c.l.s4 1983009808
      %v1206 = vunpack.c.0.s8 %v1205
      %v1207 = vlaneseq
      %v1208 = vshrl.u32 %v1207, 7
      %v1209 = vsub.s32 %v1206, %v1208
      %v1210 = vrot.slane %v1203, %v1209
      %v1211 = vcombine.low %v1202, %v1210
      %v1213 = vunpack.c.l.s4 1934713408
      %v1214 = vunpack.c.0.s8 %v1213
      %v1215 = vlaneseq
      %v1216 = vshrl.u32 %v1215, 7
      %v1217 = vsub.s32 %v1214, %v1216
      %v1218 = vrot.slane %v1211, %v1217
      %v1219 = vcombine.high %v1218, 0
      %v1222 = vpack.i.b16 %v1218, %v1193
      %v1223 = vshrl.u32 %v1193, 16
      %v1224 = vshrl.u32 %v1218, 16
      %v1225 = vpack.i.b16 %v1224, %v1223
      %v1228 = vpack.i.b16 %v1219, %v1194
      %v1229 = vshrl.u32 %v1194, 16
      %v1230 = vshrl.u32 %v1219, 16
      %v1231 = vpack.i.b16 %v1230, %v1229
      %vm1232 = vcmask 261120
      %v1234 = vsel %vm1232, %v886, 0
      %v1237 = vsel %vm1232, %v1054, 0
      %1239 = vmatprep.subr.bf16.mxu0 0
      %1240 = vmatpush1.bf16.xpose.msra.mxu0 0
      %1241 = vmatprep.subr.bf16.mxu0 0
      %1242 = vmatpush1.bf16.xpose.msra.mxu0 0
      %1243 = vmatprep.subr.bf16.mxu0 0
      %1244 = vmatpush1.bf16.xpose.msra.mxu0 0
      %1245 = vmatprep.subr.bf16.mxu0 0
      %1246 = vmatpush1.bf16.xpose.msra.mxu0 0
      %1247 = vmatprep.subr.bf16.mxu0 0
      %1248 = vmatpush1.bf16.xpose.msra.mxu0 0
      %1249 = vmatprep.subr.bf16.mxu0 0
      %1250 = vmatpush1.bf16.xpose.msra.mxu0 0
      %1251 = vmatprep.subr.bf16.mxu0 0
      %1252 = vmatpush1.bf16.xpose.msra.mxu0 0
      %1253 = vmatprep.subr.bf16.mxu0 0
      %1254 = vmatpush1.bf16.xpose.msra.mxu0 %v1237
      %1255 = vmatprep.subr.bf16.mxu0 0
      %1256 = vmatpush2.bf16.xpose.msra.mxu0 0
      %1257 = vmatprep.subr.bf16.mxu0 0
      %1258 = vmatpush2.bf16.xpose.msra.mxu0 0
      %1259 = vmatprep.subr.bf16.mxu0 0
      %1260 = vmatpush2.bf16.xpose.msra.mxu0 0
      %1261 = vmatprep.subr.bf16.mxu0 0
      %1262 = vmatpush2.bf16.xpose.msra.mxu0 0
      %1263 = vmatprep.subr.bf16.mxu0 0
      %1264 = vmatpush2.bf16.xpose.msra.mxu0 0
      %1265 = vmatprep.subr.bf16.mxu0 0
      %1266 = vmatpush2.bf16.xpose.msra.mxu0 0
      %1267 = vmatprep.subr.bf16.mxu0 0
      %1268 = vmatpush2.bf16.xpose.msra.mxu0 0
      %1269 = vmatprep.subr.bf16.mxu0 0
      %1270 = vmatpush2.bf16.xpose.msra.mxu0 0
      %1271 = vmatprep.mubr.bf16.mxu0 0
      %1272 = vmatmul.mubr.bf16.gmra.mxu0 %v1234
      %v1273 = vpop.f32.mrf.mxu0
      %v1274 = vadd.f32 0.0, %v1273
      %v1275 = vpop.f32.mrf.mxu0
      %v1276 = vpop.f32.mrf.mxu0
      %v1277 = vpop.f32.mrf.mxu0
      %1278 = vdwg.mxu0
      %v1280 = vsel %vm1232, %v889, 0
      %v1283 = vsel %vm1232, %v1057, 0
      %1285 = vmatprep.subr.bf16.mxu0 0
      %1286 = vmatpush1.bf16.xpose.msra.mxu0 0
      %1287 = vmatprep.subr.bf16.mxu0 0
      %1288 = vmatpush1.bf16.xpose.msra.mxu0 0
      %1289 = vmatprep.subr.bf16.mxu0 0
      %1290 = vmatpush1.bf16.xpose.msra.mxu0 0
      %1291 = vmatprep.subr.bf16.mxu0 0
      %1292 = vmatpush1.bf16.xpose.msra.mxu0 0
      %1293 = vmatprep.subr.bf16.mxu0 0
      %1294 = vmatpush1.bf16.xpose.msra.mxu0 0
      %1295 = vmatprep.subr.bf16.mxu0 0
      %1296 = vmatpush1.bf16.xpose.msra.mxu0 0
      %1297 = vmatprep.subr.bf16.mxu0 0
      %1298 = vmatpush1.bf16.xpose.msra.mxu0 0
      %1299 = vmatprep.subr.bf16.mxu0 0
      %1300 = vmatpush1.bf16.xpose.msra.mxu0 %v1283
      %1301 = vmatprep.subr.bf16.mxu0 0
      %1302 = vmatpush2.bf16.xpose.msra.mxu0 0
      %1303 = vmatprep.subr.bf16.mxu0 0
      %1304 = vmatpush2.bf16.xpose.msra.mxu0 0
      %1305 = vmatprep.subr.bf16.mxu0 0
      %1306 = vmatpush2.bf16.xpose.msra.mxu0 0
      %1307 = vmatprep.subr.bf16.mxu0 0
      %1308 = vmatpush2.bf16.xpose.msra.mxu0 0
      %1309 = vmatprep.subr.bf16.mxu0 0
      %1310 = vmatpush2.bf16.xpose.msra.mxu0 0
      %1311 = vmatprep.subr.bf16.mxu0 0
      %1312 = vmatpush2.bf16.xpose.msra.mxu0 0
      %1313 = vmatprep.subr.bf16.mxu0 0
      %1314 = vmatpush2.bf16.xpose.msra.mxu0 0
      %1315 = vmatprep.subr.bf16.mxu0 0
      %1316 = vmatpush2.bf16.xpose.msra.mxu0 0
      %1317 = vmatprep.mubr.bf16.mxu0 0
      %1318 = vmatmul.mubr.bf16.gmra.mxu0 %v1280
      %v1319 = vpop.f32.mrf.mxu0
      %v1320 = vadd.f32 0.0, %v1319
      %v1321 = vpop.f32.mrf.mxu0
      %v1322 = vpop.f32.mrf.mxu0
      %v1323 = vpop.f32.mrf.mxu0
      %1324 = vdwg.mxu0
      %v1326 = vsel %vm1232, %v892, 0
      %v1329 = vsel %vm1232, %v1060, 0
      %1331 = vmatprep.subr.bf16.mxu0 0
      %1332 = vmatpush1.bf16.xpose.msra.mxu0 0
      %1333 = vmatprep.subr.bf16.mxu0 0
      %1334 = vmatpush1.bf16.xpose.msra.mxu0 0
      %1335 = vmatprep.subr.bf16.mxu0 0
      %1336 = vmatpush1.bf16.xpose.msra.mxu0 0
      %1337 = vmatprep.subr.bf16.mxu0 0
      %1338 = vmatpush1.bf16.xpose.msra.mxu0 0
      %1339 = vmatprep.subr.bf16.mxu0 0
      %1340 = vmatpush1.bf16.xpose.msra.mxu0 0
      %1341 = vmatprep.subr.bf16.mxu0 0
      %1342 = vmatpush1.bf16.xpose.msra.mxu0 0
      %1343 = vmatprep.subr.bf16.mxu0 0
      %1344 = vmatpush1.bf16.xpose.msra.mxu0 0
      %1345 = vmatprep.subr.bf16.mxu0 0
      %1346 = vmatpush1.bf16.xpose.msra.mxu0 %v1329
      %1347 = vmatprep.subr.bf16.mxu0 0
      %1348 = vmatpush2.bf16.xpose.msra.mxu0 0
      %1349 = vmatprep.subr.bf16.mxu0 0
      %1350 = vmatpush2.bf16.xpose.msra.mxu0 0
      %1351 = vmatprep.subr.bf16.mxu0 0
      %1352 = vmatpush2.bf16.xpose.msra.mxu0 0
      %1353 = vmatprep.subr.bf16.mxu0 0
      %1354 = vmatpush2.bf16.xpose.msra.mxu0 0
      %1355 = vmatprep.subr.bf16.mxu0 0
      %1356 = vmatpush2.bf16.xpose.msra.mxu0 0
      %1357 = vmatprep.subr.bf16.mxu0 0
      %1358 = vmatpush2.bf16.xpose.msra.mxu0 0
      %1359 = vmatprep.subr.bf16.mxu0 0
      %1360 = vmatpush2.bf16.xpose.msra.mxu0 0
      %1361 = vmatprep.subr.bf16.mxu0 0
      %1362 = vmatpush2.bf16.xpose.msra.mxu0 0
      %1363 = vmatprep.mubr.bf16.mxu0 0
      %1364 = vmatmul.mubr.bf16.gmra.mxu0 %v1326
      %v1365 = vpop.f32.mrf.mxu0
      %v1366 = vadd.f32 0.0, %v1365
      %v1367 = vpop.f32.mrf.mxu0
      %v1368 = vpop.f32.mrf.mxu0
      %v1369 = vpop.f32.mrf.mxu0
      %1370 = vdwg.mxu0
      %v1372 = vsel %vm1232, %v895, 0
      %v1375 = vsel %vm1232, %v1063, 0
      %1377 = vmatprep.subr.bf16.mxu0 0
      %1378 = vmatpush1.bf16.xpose.msra.mxu0 0
      %1379 = vmatprep.subr.bf16.mxu0 0
      %1380 = vmatpush1.bf16.xpose.msra.mxu0 0
      %1381 = vmatprep.subr.bf16.mxu0 0
      %1382 = vmatpush1.bf16.xpose.msra.mxu0 0
      %1383 = vmatprep.subr.bf16.mxu0 0
      %1384 = vmatpush1.bf16.xpose.msra.mxu0 0
      %1385 = vmatprep.subr.bf16.mxu0 0
      %1386 = vmatpush1.bf16.xpose.msra.mxu0 0
      %1387 = vmatprep.subr.bf16.mxu0 0
      %1388 = vmatpush1.bf16.xpose.msra.mxu0 0
      %1389 = vmatprep.subr.bf16.mxu0 0
      %1390 = vmatpush1.bf16.xpose.msra.mxu0 0
      %1391 = vmatprep.subr.bf16.mxu0 0
      %1392 = vmatpush1.bf16.xpose.msra.mxu0 %v1375
      %1393 = vmatprep.subr.bf16.mxu0 0
      %1394 = vmatpush2.bf16.xpose.msra.mxu0 0
      %1395 = vmatprep.subr.bf16.mxu0 0
      %1396 = vmatpush2.bf16.xpose.msra.mxu0 0
      %1397 = vmatprep.subr.bf16.mxu0 0
      %1398 = vmatpush2.bf16.xpose.msra.mxu0 0
      %1399 = vmatprep.subr.bf16.mxu0 0
      %1400 = vmatpush2.bf16.xpose.msra.mxu0 0
      %1401 = vmatprep.subr.bf16.mxu0 0
      %1402 = vmatpush2.bf16.xpose.msra.mxu0 0
      %1403 = vmatprep.subr.bf16.mxu0 0
      %1404 = vmatpush2.bf16.xpose.msra.mxu0 0
      %1405 = vmatprep.subr.bf16.mxu0 0
      %1406 = vmatpush2.bf16.xpose.msra.mxu0 0
      %1407 = vmatprep.subr.bf16.mxu0 0
      %1408 = vmatpush2.bf16.xpose.msra.mxu0 0
      %1409 = vmatprep.mubr.bf16.mxu0 0
      %1410 = vmatmul.mubr.bf16.gmra.mxu0 %v1372
      %v1411 = vpop.f32.mrf.mxu0
      %v1412 = vadd.f32 0.0, %v1411
      %v1413 = vpop.f32.mrf.mxu0
      %v1414 = vpop.f32.mrf.mxu0
      %v1415 = vpop.f32.mrf.mxu0
      %1416 = vdwg.mxu0
      %v1417 = vlaneseq
      %v1418 = vand.u32 %v1417, 127
      %vm1419 = vcmp.lt.s32.totalorder %v1418, 5
      %v1420 = vsel %vm1419, 1, 0
      %vm1421 = vcmp.eq.s32.totalorder %v1420, 1
      %v1422 = vsel %vm1421, %v1274, -1e+30
      %v1423 = vsel %vm1421, %v1320, -1e+30
      %v1424 = vsel %vm1421, %v1366, -1e+30
      %v1425 = vsel %vm1421, %v1412, -1e+30
      %vm1426 = vcmask 64512
      %v1427 = vsel %vm1426, %v1422, -inf
      %1428 = vmax.xlane.f32.xlu0 %v1427
      %v1429 = vpop.xlane.xlu0 %1428
      %v1430 = vsel %vm1426, %v1423, -inf
      %1431 = vmax.xlane.f32.xlu0 %v1430
      %v1432 = vpop.xlane.xlu0 %1431
      %v1433 = vsel %vm1426, %v1424, -inf
      %1434 = vmax.xlane.f32.xlu0 %v1433
      %v1435 = vpop.xlane.xlu0 %1434
      %v1436 = vsel %vm1426, %v1425, -inf
      %1437 = vmax.xlane.f32.xlu0 %v1436
      %v1438 = vpop.xlane.xlu0 %1437
      %v1439 = vsub.f32 %v1422, %v1429
      %v1440 = vsub.f32 %v1423, %v1432
      %v1441 = vsub.f32 %v1424, %v1435
      %v1442 = vsub.f32 %v1425, %v1438
      %v1443 = vmul.f32 %v1439, 1.442695
      %v1444 = vpow.pop %v1443
      %v1445 = vmul.f32 %v1440, 1.442695
      %v1446 = vpow.pop %v1445
      %v1447 = vmul.f32 %v1441, 1.442695
      %v1448 = vpow.pop %v1447
      %v1449 = vmul.f32 %v1442, 1.442695
      %v1450 = vpow.pop %v1449
      %v1451 = vsel %vm1426, %v1444, 0.0
      %1452 = vadd.xlane.f32.xlu0 %v1451
      %v1453 = vpop.xlane.xlu0 %1452
      %v1454 = vsel %vm1426, %v1446, 0.0
      %1455 = vadd.xlane.f32.xlu0 %v1454
      %v1456 = vpop.xlane.xlu0 %1455
      %v1457 = vsel %vm1426, %v1448, 0.0
      %1458 = vadd.xlane.f32.xlu0 %v1457
      %v1459 = vpop.xlane.xlu0 %1458
      %v1460 = vsel %vm1426, %v1450, 0.0
      %1461 = vadd.xlane.f32.xlu0 %v1460
      %v1462 = vpop.xlane.xlu0 %1461
      %v1463 = vrcp.pop %v1453
      %v1464 = vrcp.pop %v1456
      %v1465 = vrcp.pop %v1459
      %v1466 = vrcp.pop %v1462
      %v1467 = vmul.f32 %v1444, %v1463
      %v1468 = vmul.f32 %v1446, %v1464
      %v1469 = vmul.f32 %v1448, %v1465
      %v1470 = vmul.f32 %v1450, %v1466
      %v1471 = vpack.c.bf16 %v1467, %v1467
      %v1472 = vpack.c.bf16 %v1468, %v1468
      %v1473 = vpack.c.bf16 %v1469, %v1469
      %v1474 = vpack.c.bf16 %v1470, %v1470
      %v1476 = vsel %vm1426, %v1471, 0
      %vm1478 = vcmask 1043456
      %v1480 = vsel %vm1478, %v1222, 0
      %1482 = vmatprep.subr.bf16.mxu0 0
      %1483 = vmatpush1.bf16.msra.mxu0 0
      %1484 = vmatprep.subr.bf16.mxu0 0
      %1485 = vmatpush1.bf16.msra.mxu0 0
      %1486 = vmatprep.subr.bf16.mxu0 0
      %1487 = vmatpush1.bf16.msra.mxu0 0
      %1488 = vmatprep.subr.bf16.mxu0 0
      %1489 = vmatpush1.bf16.msra.mxu0 0
      %1490 = vmatprep.subr.bf16.mxu0 0
      %1491 = vmatpush1.bf16.msra.mxu0 0
      %1492 = vmatprep.subr.bf16.mxu0 0
      %1493 = vmatpush1.bf16.msra.mxu0 0
      %1494 = vmatprep.subr.bf16.mxu0 0
      %1495 = vmatpush1.bf16.msra.mxu0 0
      %1496 = vmatprep.subr.bf16.mxu0 0
      %1497 = vmatpush1.bf16.msra.mxu0 %v1480
      %1498 = vmatprep.subr.bf16.mxu0 0
      %1499 = vmatpush2.bf16.msra.mxu0 0
      %1500 = vmatprep.subr.bf16.mxu0 0
      %1501 = vmatpush2.bf16.msra.mxu0 0
      %1502 = vmatprep.subr.bf16.mxu0 0
      %1503 = vmatpush2.bf16.msra.mxu0 0
      %1504 = vmatprep.subr.bf16.mxu0 0
      %1505 = vmatpush2.bf16.msra.mxu0 0
      %1506 = vmatprep.subr.bf16.mxu0 0
      %1507 = vmatpush2.bf16.msra.mxu0 0
      %1508 = vmatprep.subr.bf16.mxu0 0
      %1509 = vmatpush2.bf16.msra.mxu0 0
      %1510 = vmatprep.subr.bf16.mxu0 0
      %1511 = vmatpush2.bf16.msra.mxu0 0
      %1512 = vmatprep.subr.bf16.mxu0 0
      %1513 = vmatpush2.bf16.msra.mxu0 0
      %1514 = vmatprep.mubr.bf16.mxu0 0
      %1515 = vmatmul.mubr.bf16.gmra.mxu0 %v1476
      %v1516 = vpop.f32.mrf.mxu0
      %v1517 = vadd.f32 0.0, %v1516
      %v1518 = vpop.f32.mrf.mxu0
      %v1519 = vpop.f32.mrf.mxu0
      %v1520 = vpop.f32.mrf.mxu0
      %1521 = vdwg.mxu0
      %v1523 = vsel %vm1426, %v1472, 0
      %v1526 = vsel %vm1478, %v1225, 0
      %1528 = vmatprep.subr.bf16.mxu0 0
      %1529 = vmatpush1.bf16.msra.mxu0 0
      %1530 = vmatprep.subr.bf16.mxu0 0
      %1531 = vmatpush1.bf16.msra.mxu0 0
      %1532 = vmatprep.subr.bf16.mxu0 0
      %1533 = vmatpush1.bf16.msra.mxu0 0
      %1534 = vmatprep.subr.bf16.mxu0 0
      %1535 = vmatpush1.bf16.msra.mxu0 0
      %1536 = vmatprep.subr.bf16.mxu0 0
      %1537 = vmatpush1.bf16.msra.mxu0 0
      %1538 = vmatprep.subr.bf16.mxu0 0
      %1539 = vmatpush1.bf16.msra.mxu0 0
      %1540 = vmatprep.subr.bf16.mxu0 0
      %1541 = vmatpush1.bf16.msra.mxu0 0
      %1542 = vmatprep.subr.bf16.mxu0 0
      %1543 = vmatpush1.bf16.msra.mxu0 %v1526
      %1544 = vmatprep.subr.bf16.mxu0 0
      %1545 = vmatpush2.bf16.msra.mxu0 0
      %1546 = vmatprep.subr.bf16.mxu0 0
      %1547 = vmatpush2.bf16.msra.mxu0 0
      %1548 = vmatprep.subr.bf16.mxu0 0
      %1549 = vmatpush2.bf16.msra.mxu0 0
      %1550 = vmatprep.subr.bf16.mxu0 0
      %1551 = vmatpush2.bf16.msra.mxu0 0
      %1552 = vmatprep.subr.bf16.mxu0 0
      %1553 = vmatpush2.bf16.msra.mxu0 0
      %1554 = vmatprep.subr.bf16.mxu0 0
      %1555 = vmatpush2.bf16.msra.mxu0 0
      %1556 = vmatprep.subr.bf16.mxu0 0
      %1557 = vmatpush2.bf16.msra.mxu0 0
      %1558 = vmatprep.subr.bf16.mxu0 0
      %1559 = vmatpush2.bf16.msra.mxu0 0
      %1560 = vmatprep.mubr.bf16.mxu0 0
      %1561 = vmatmul.mubr.bf16.gmra.mxu0 %v1523
      %v1562 = vpop.f32.mrf.mxu0
      %v1563 = vadd.f32 0.0, %v1562
      %v1564 = vpop.f32.mrf.mxu0
      %v1565 = vpop.f32.mrf.mxu0
      %v1566 = vpop.f32.mrf.mxu0
      %1567 = vdwg.mxu0
      %v1569 = vsel %vm1426, %v1473, 0
      %v1572 = vsel %vm1478, %v1228, 0
      %1574 = vmatprep.subr.bf16.mxu0 0
      %1575 = vmatpush1.bf16.msra.mxu0 0
      %1576 = vmatprep.subr.bf16.mxu0 0
      %1577 = vmatpush1.bf16.msra.mxu0 0
      %1578 = vmatprep.subr.bf16.mxu0 0
      %1579 = vmatpush1.bf16.msra.mxu0 0
      %1580 = vmatprep.subr.bf16.mxu0 0
      %1581 = vmatpush1.bf16.msra.mxu0 0
      %1582 = vmatprep.subr.bf16.mxu0 0
      %1583 = vmatpush1.bf16.msra.mxu0 0
      %1584 = vmatprep.subr.bf16.mxu0 0
      %1585 = vmatpush1.bf16.msra.mxu0 0
      %1586 = vmatprep.subr.bf16.mxu0 0
      %1587 = vmatpush1.bf16.msra.mxu0 0
      %1588 = vmatprep.subr.bf16.mxu0 0
      %1589 = vmatpush1.bf16.msra.mxu0 %v1572
      %1590 = vmatprep.subr.bf16.mxu0 0
      %1591 = vmatpush2.bf16.msra.mxu0 0
      %1592 = vmatprep.subr.bf16.mxu0 0
      %1593 = vmatpush2.bf16.msra.mxu0 0
      %1594 = vmatprep.subr.bf16.mxu0 0
      %1595 = vmatpush2.bf16.msra.mxu0 0
      %1596 = vmatprep.subr.bf16.mxu0 0
      %1597 = vmatpush2.bf16.msra.mxu0 0
      %1598 = vmatprep.subr.bf16.mxu0 0
      %1599 = vmatpush2.bf16.msra.mxu0 0
      %1600 = vmatprep.subr.bf16.mxu0 0
      %1601 = vmatpush2.bf16.msra.mxu0 0
      %1602 = vmatprep.subr.bf16.mxu0 0
      %1603 = vmatpush2.bf16.msra.mxu0 0
      %1604 = vmatprep.subr.bf16.mxu0 0
      %1605 = vmatpush2.bf16.msra.mxu0 0
      %1606 = vmatprep.mubr.bf16.mxu0 0
      %1607 = vmatmul.mubr.bf16.gmra.mxu0 %v1569
      %v1608 = vpop.f32.mrf.mxu0
      %v1609 = vadd.f32 0.0, %v1608
      %v1610 = vpop.f32.mrf.mxu0
      %v1611 = vpop.f32.mrf.mxu0
      %v1612 = vpop.f32.mrf.mxu0
      %1613 = vdwg.mxu0
      %v1615 = vsel %vm1426, %v1474, 0
      %v1618 = vsel %vm1478, %v1231, 0
      %1620 = vmatprep.subr.bf16.mxu0 0
      %1621 = vmatpush1.bf16.msra.mxu0 0
      %1622 = vmatprep.subr.bf16.mxu0 0
      %1623 = vmatpush1.bf16.msra.mxu0 0
      %1624 = vmatprep.subr.bf16.mxu0 0
      %1625 = vmatpush1.bf16.msra.mxu0 0
      %1626 = vmatprep.subr.bf16.mxu0 0
      %1627 = vmatpush1.bf16.msra.mxu0 0
      %1628 = vmatprep.subr.bf16.mxu0 0
      %1629 = vmatpush1.bf16.msra.mxu0 0
      %1630 = vmatprep.subr.bf16.mxu0 0
      %1631 = vmatpush1.bf16.msra.mxu0 0
      %1632 = vmatprep.subr.bf16.mxu0 0
      %1633 = vmatpush1.bf16.msra.mxu0 0
      %1634 = vmatprep.subr.bf16.mxu0 0
      %1635 = vmatpush1.bf16.msra.mxu0 %v1618
      %1636 = vmatprep.subr.bf16.mxu0 0
      %1637 = vmatpush2.bf16.msra.mxu0 0
      %1638 = vmatprep.subr.bf16.mxu0 0
      %1639 = vmatpush2.bf16.msra.mxu0 0
      %1640 = vmatprep.subr.bf16.mxu0 0
      %1641 = vmatpush2.bf16.msra.mxu0 0
      %1642 = vmatprep.subr.bf16.mxu0 0
      %1643 = vmatpush2.bf16.msra.mxu0 0
      %1644 = vmatprep.subr.bf16.mxu0 0
      %1645 = vmatpush2.bf16.msra.mxu0 0
      %1646 = vmatprep.subr.bf16.mxu0 0
      %1647 = vmatpush2.bf16.msra.mxu0 0
      %1648 = vmatprep.subr.bf16.mxu0 0
      %1649 = vmatpush2.bf16.msra.mxu0 0
      %1650 = vmatprep.subr.bf16.mxu0 0
      %1651 = vmatpush2.bf16.msra.mxu0 0
      %1652 = vmatprep.mubr.bf16.mxu0 0
      %1653 = vmatmul.mubr.bf16.gmra.mxu0 %v1615
      %v1654 = vpop.f32.mrf.mxu0
      %v1655 = vadd.f32 0.0, %v1654
      %v1656 = vpop.f32.mrf.mxu0
      %v1657 = vpop.f32.mrf.mxu0
      %v1658 = vpop.f32.mrf.mxu0
      %1659 = vdwg.mxu0
      %v1660 = vcombine.low %v1517, %v1609
      %v1661 = vcombine.high %v1517, %v1609
      %v1663 = vunpack.c.l.s4 1983009808
      %v1664 = vunpack.c.0.s8 %v1663
      %v1665 = vlaneseq
      %v1666 = vshrl.u32 %v1665, 7
      %v1667 = vsub.s32 %v1664, %v1666
      %v1668 = vrot.slane %v1660, %v1667
      %v1670 = vunpack.c.l.s4 1983009808
      %v1671 = vunpack.c.0.s8 %v1670
      %v1672 = vlaneseq
      %v1673 = vshrl.u32 %v1672, 7
      %v1674 = vsub.s32 %v1671, %v1673
      %v1675 = vrot.slane %v1661, %v1674
      %v1676 = vcombine.low %v1563, %v1655
      %v1677 = vcombine.high %v1563, %v1655
      %v1679 = vunpack.c.l.s4 1983009808
      %v1680 = vunpack.c.0.s8 %v1679
      %v1681 = vlaneseq
      %v1682 = vshrl.u32 %v1681, 7
      %v1683 = vsub.s32 %v1680, %v1682
      %v1684 = vrot.slane %v1676, %v1683
      %v1686 = vunpack.c.l.s4 1983009808
      %v1687 = vunpack.c.0.s8 %v1686
      %v1688 = vlaneseq
      %v1689 = vshrl.u32 %v1688, 7
      %v1690 = vsub.s32 %v1687, %v1689
      %v1691 = vrot.slane %v1677, %v1690
      %v1692 = vcombine.low %v1668, %v1684
      %v1693 = vcombine.high %v1668, %v1684
      %v1695 = vunpack.c.l.s4 1934713408
      %v1696 = vunpack.c.0.s8 %v1695
      %v1697 = vlaneseq
      %v1698 = vshrl.u32 %v1697, 7
      %v1699 = vsub.s32 %v1696, %v1698
      %v1700 = vrot.slane %v1692, %v1699
      %v1702 = vunpack.c.l.s4 1934713408
      %v1703 = vunpack.c.0.s8 %v1702
      %v1704 = vlaneseq
      %v1705 = vshrl.u32 %v1704, 7
      %v1706 = vsub.s32 %v1703, %v1705
      %v1707 = vrot.slane %v1693, %v1706
      %v1708 = vcombine.low %v1675, %v1691
      %v1709 = vcombine.high %v1675, %v1691
      %v1711 = vunpack.c.l.s4 1934713408
      %v1712 = vunpack.c.0.s8 %v1711
      %v1713 = vlaneseq
      %v1714 = vshrl.u32 %v1713, 7
      %v1715 = vsub.s32 %v1712, %v1714
      %v1716 = vrot.slane %v1708, %v1715
      %v1718 = vunpack.c.l.s4 1934713408
      %v1719 = vunpack.c.0.s8 %v1718
      %v1720 = vlaneseq
      %v1721 = vshrl.u32 %v1720, 7
      %v1722 = vsub.s32 %v1719, %v1721
      %v1723 = vrot.slane %v1709, %v1722
      %v1724 = vcombine.high %v1700, 0.0
      %v1725 = vcombine.high %v1707, 0.0
      %v1726 = vcombine.high %v1716, 0.0
      %v1727 = vcombine.high %v1723, 0.0
      %v1728 = vcombine.low %v1700, %v1707
      %v1730 = vunpack.c.l.s4 1983009808
      %v1731 = vunpack.c.0.s8 %v1730
      %v1732 = vlaneseq
      %v1733 = vshrl.u32 %v1732, 7
      %v1734 = vsub.s32 %v1731, %v1733
      %v1735 = vrot.slane %v1728, %v1734
      %v1736 = vcombine.low %v1724, %v1725
      %v1738 = vunpack.c.l.s4 1983009808
      %v1739 = vunpack.c.0.s8 %v1738
      %v1740 = vlaneseq
      %v1741 = vshrl.u32 %v1740, 7
      %v1742 = vsub.s32 %v1739, %v1741
      %v1743 = vrot.slane %v1736, %v1742
      %v1744 = vcombine.low %v1716, %v1723
      %v1746 = vunpack.c.l.s4 1983009808
      %v1747 = vunpack.c.0.s8 %v1746
      %v1748 = vlaneseq
      %v1749 = vshrl.u32 %v1748, 7
      %v1750 = vsub.s32 %v1747, %v1749
      %v1751 = vrot.slane %v1744, %v1750
      %v1752 = vcombine.low %v1726, %v1727
      %v1754 = vunpack.c.l.s4 1983009808
      %v1755 = vunpack.c.0.s8 %v1754
      %v1756 = vlaneseq
      %v1757 = vshrl.u32 %v1756, 7
      %v1758 = vsub.s32 %v1755, %v1757
      %v1759 = vrot.slane %v1752, %v1758
      %v1760 = vcombine.low %v1735, %v1743
      %v1761 = vcombine.high %v1735, %v1743
      %v1763 = vunpack.c.l.s4 1934713408
      %v1764 = vunpack.c.0.s8 %v1763
      %v1765 = vlaneseq
      %v1766 = vshrl.u32 %v1765, 7
      %v1767 = vsub.s32 %v1764, %v1766
      %v1768 = vrot.slane %v1760, %v1767
      %v1770 = vunpack.c.l.s4 1934713408
      %v1771 = vunpack.c.0.s8 %v1770
      %v1772 = vlaneseq
      %v1773 = vshrl.u32 %v1772, 7
      %v1774 = vsub.s32 %v1771, %v1773
      %v1775 = vrot.slane %v1761, %v1774
      %v1776 = vcombine.low %v1751, %v1759
      %v1777 = vcombine.high %v1751, %v1759
      %v1779 = vunpack.c.l.s4 1934713408
      %v1780 = vunpack.c.0.s8 %v1779
      %v1781 = vlaneseq
      %v1782 = vshrl.u32 %v1781, 7
      %v1783 = vsub.s32 %v1780, %v1782
      %v1784 = vrot.slane %v1776, %v1783
      %v1786 = vunpack.c.l.s4 1934713408
      %v1787 = vunpack.c.0.s8 %v1786
      %v1788 = vlaneseq
      %v1789 = vshrl.u32 %v1788, 7
      %v1790 = vsub.s32 %v1787, %v1789
      %v1791 = vrot.slane %v1777, %v1790
      %v1792 = vcombine.low %v1768, %v1784
      %v1793 = vcombine.high %v1768, %v1784
      %v1794 = vcombine.low %v1775, %v1791
      %v1795 = vcombine.high %v1775, %v1791
      %1797 = vrot.lane.b32.xlu0 %v1793, 32
      %v1798 = vpop.permute.xlu0 %1797
      %1801 = vrot.lane.b32.xlu0 %v1794, 64
      %v1802 = vpop.permute.xlu0 %1801
      %1805 = vrot.lane.b32.xlu0 %v1795, 96
      %v1806 = vpop.permute.xlu0 %1805
      %v1808 = vsel %vm1232, %v1792, %v1798
      %vm1809 = vcmask 523264
      %v1810 = vsel %vm1809, %v1808, %v1802
      %vm1811 = vcmask 785408
      %v1812 = vsel %vm1811, %v1810, %v1806
      %v1813 = vpack.c.bf16 %v1812, %v1812
      %v1814 = vld [vmem:[%s5] sm:$0xf]
      %v1815 = vld [vmem:[%s5 + $0x4] sm:$0xf]
      %v1816 = vld [vmem:[%s5 + $0x8] sm:$0xf]
      %v1817 = vld [vmem:[%s5 + $0xc] sm:$0xf]
      %v1818 = vld [vmem:[%s5 + $0x10] sm:$0xf]
      %v1819 = vld [vmem:[%s5 + $0x14] sm:$0xf]
      %v1820 = vld [vmem:[%s5 + $0x18] sm:$0xf]
      %v1821 = vld [vmem:[%s5 + $0x1c] sm:$0xf]
      %v1822 = vld [vmem:[%s5 + $0x20] sm:$0xf]
      %v1823 = vld [vmem:[%s5 + $0x24] sm:$0xf]
      %v1824 = vld [vmem:[%s5 + $0x28] sm:$0xf]
      %v1825 = vld [vmem:[%s5 + $0x2c] sm:$0xf]
      %v1826 = vld [vmem:[%s5 + $0x30] sm:$0xf]
      %v1827 = vld [vmem:[%s5 + $0x34] sm:$0xf]
      %v1828 = vld [vmem:[%s5 + $0x38] sm:$0xf]
      %v1829 = vld [vmem:[%s5 + $0x3c] sm:$0xf]
      %v1830 = vld [vmem:[%s6] sm:$0x1]
      %v1832 = vlaneseq
      %v1833 = vshrl.u32 %v1832, 7
      %v1834 = vsub.s32 0, %v1833
      %v1835 = vrot.slane %v1830, %v1834
      %v1853 = vunpack.c.l.b16 %v1814
      %v1854 = vunpack.c.l.b16 %v1815
      %v1855 = vunpack.c.l.b16 %v1816
      %v1856 = vunpack.c.l.b16 %v1817
      %v1857 = vunpack.c.l.b16 %v1818
      %v1858 = vunpack.c.l.b16 %v1819
      %v1859 = vunpack.c.l.b16 %v1820
      %v1860 = vunpack.c.l.b16 %v1821
      %v1861 = vunpack.c.l.b16 %v1822
      %v1862 = vunpack.c.l.b16 %v1823
      %v1863 = vunpack.c.l.b16 %v1824
      %v1864 = vunpack.c.l.b16 %v1825
      %v1865 = vunpack.c.l.b16 %v1826
      %v1866 = vunpack.c.l.b16 %v1827
      %v1867 = vunpack.c.l.b16 %v1828
      %v1868 = vunpack.c.l.b16 %v1829
      %v1869 = vpack.c.b16 %v1854, %v1853
      %v1870 = vpack.c.b16 %v1856, %v1855
      %v1871 = vpack.c.b16 %v1858, %v1857
      %v1872 = vpack.c.b16 %v1860, %v1859
      %v1873 = vpack.c.b16 %v1862, %v1861
      %v1874 = vpack.c.b16 %v1864, %v1863
      %v1875 = vpack.c.b16 %v1866, %v1865
      %v1876 = vpack.c.b16 %v1868, %v1867
      %1885 = vmatprep.subr.bf16.mxu0 0
      %1886 = vmatpush1.bf16.msra.mxu0 %v1876
      %1887 = vmatprep.subr.bf16.mxu0 0
      %1888 = vmatpush1.bf16.msra.mxu0 %v1875
      %1889 = vmatprep.subr.bf16.mxu0 0
      %1890 = vmatpush1.bf16.msra.mxu0 %v1874
      %1891 = vmatprep.subr.bf16.mxu0 0
      %1892 = vmatpush1.bf16.msra.mxu0 %v1873
      %1893 = vmatprep.subr.bf16.mxu0 0
      %1894 = vmatpush1.bf16.msra.mxu0 %v1872
      %1895 = vmatprep.subr.bf16.mxu0 0
      %1896 = vmatpush1.bf16.msra.mxu0 %v1871
      %1897 = vmatprep.subr.bf16.mxu0 0
      %1898 = vmatpush1.bf16.msra.mxu0 %v1870
      %1899 = vmatprep.subr.bf16.mxu0 0
      %1900 = vmatpush1.bf16.msra.mxu0 %v1869
      %1901 = vmatprep.subr.bf16.mxu0 0
      %1902 = vmatpush2.bf16.msra.mxu0 0
      %1903 = vmatprep.subr.bf16.mxu0 0
      %1904 = vmatpush2.bf16.msra.mxu0 0
      %1905 = vmatprep.subr.bf16.mxu0 0
      %1906 = vmatpush2.bf16.msra.mxu0 0
      %1907 = vmatprep.subr.bf16.mxu0 0
      %1908 = vmatpush2.bf16.msra.mxu0 0
      %1909 = vmatprep.subr.bf16.mxu0 0
      %1910 = vmatpush2.bf16.msra.mxu0 0
      %1911 = vmatprep.subr.bf16.mxu0 0
      %1912 = vmatpush2.bf16.msra.mxu0 0
      %1913 = vmatprep.subr.bf16.mxu0 0
      %1914 = vmatpush2.bf16.msra.mxu0 0
      %1915 = vmatprep.subr.bf16.mxu0 0
      %1916 = vmatpush2.bf16.msra.mxu0 0
      %1917 = vmatprep.mubr.bf16.mxu0 0
      %1918 = vmatmul.mubr.bf16.gmra.mxu0 %v1813
      %v1919 = vpop.f32.mrf.mxu0
      %v1920 = vadd.f32 %v1835, %v1919
      %v1921 = vpop.f32.mrf.mxu0
      %v1922 = vpop.f32.mrf.mxu0
      %v1923 = vpop.f32.mrf.mxu0
      %1924 = vdwg.mxu0
      %v1925 = vadd.f32 %v437, %v1920
      %v1926 = vld [vmem:[%s7] sm:$0x1]
      %v1927 = vld [vmem:[%s8] sm:$0x1]
      %1928 = vadd.xlane.f32.xlu0 %v1925
      %v1929 = vpop.xlane.xlu0 %1928
      %v1930 = vmul.f32 %v1929, %v442
      %v1931 = vsub.f32 %v1925, %v1930
      %v1932 = vmul.f32 %v1931, %v1931
      %1933 = vadd.xlane.f32.xlu0 %v1932
      %v1934 = vpop.xlane.xlu0 %1933
      %v1935 = vmul.f32 %v1934, %v442
      %v1936 = vadd.f32 %v1935, 1e-06
      %v1937 = vrsqrt.pop %v1936
      %v1938 = vmul.f32 %v1931, %v1937
      %v1940 = vlaneseq
      %v1941 = vshrl.u32 %v1940, 7
      %v1942 = vsub.s32 0, %v1941
      %v1943 = vrot.slane %v1926, %v1942
      %v1945 = vmul.f32 %v1938, %v1943
      %v1947 = vlaneseq
      %v1948 = vshrl.u32 %v1947, 7
      %v1949 = vsub.s32 0, %v1948
      %v1950 = vrot.slane %v1927, %v1949
      %v1952 = vadd.f32 %v1945, %v1950
      %v1953 = vpack.c.bf16 %v1952, %v1952
      %v1954 = vld [vmem:[%s9] sm:$0xff]
      %v1955 = vld [vmem:[%s9 + $0x8] sm:$0xff]
      %v1956 = vld [vmem:[%s9 + $0x10] sm:$0xff]
      %v1957 = vld [vmem:[%s9 + $0x18] sm:$0xff]
      %v1958 = vld [vmem:[%s9 + $0x20] sm:$0xff]
      %v1959 = vld [vmem:[%s9 + $0x28] sm:$0xff]
      %v1960 = vld [vmem:[%s9 + $0x30] sm:$0xff]
      %v1961 = vld [vmem:[%s9 + $0x38] sm:$0xff]
      %v1962 = vld [vmem:[%s9 + $0x40] sm:$0xff]
      %v1963 = vld [vmem:[%s9 + $0x48] sm:$0xff]
      %v1964 = vld [vmem:[%s9 + $0x50] sm:$0xff]
      %v1965 = vld [vmem:[%s9 + $0x58] sm:$0xff]
      %v1966 = vld [vmem:[%s9 + $0x60] sm:$0xff]
      %v1967 = vld [vmem:[%s9 + $0x68] sm:$0xff]
      %v1968 = vld [vmem:[%s9 + $0x70] sm:$0xff]
      %v1969 = vld [vmem:[%s9 + $0x78] sm:$0xff]
      %v1970 = vld [vmem:[%s10] sm:$0x3]
      %v1972 = vlaneseq
      %v1973 = vshrl.u32 %v1972, 7
      %v1974 = vsub.s32 0, %v1973
      %v1975 = vrot.slane %v1970, %v1974
      %v1976 = vlaneseq
      %v1977 = vshrl.u32 %v1976, 7
      %v1978 = vsub.s32 1, %v1977
      %v1979 = vrot.slane %v1970, %v1978
      %v1998 = vunpack.c.l.b16 %v1954
      %v1999 = vunpack.c.h.b16 %v1954
      %v2000 = vunpack.c.l.b16 %v1955
      %v2001 = vunpack.c.h.b16 %v1955
      %v2002 = vunpack.c.l.b16 %v1956
      %v2003 = vunpack.c.h.b16 %v1956
      %v2004 = vunpack.c.l.b16 %v1957
      %v2005 = vunpack.c.h.b16 %v1957
      %v2006 = vunpack.c.l.b16 %v1958
      %v2007 = vunpack.c.h.b16 %v1958
      %v2008 = vunpack.c.l.b16 %v1959
      %v2009 = vunpack.c.h.b16 %v1959
      %v2010 = vunpack.c.l.b16 %v1960
      %v2011 = vunpack.c.h.b16 %v1960
      %v2012 = vunpack.c.l.b16 %v1961
      %v2013 = vunpack.c.h.b16 %v1961
      %v2014 = vunpack.c.l.b16 %v1962
      %v2015 = vunpack.c.h.b16 %v1962
      %v2016 = vunpack.c.l.b16 %v1963
      %v2017 = vunpack.c.h.b16 %v1963
      %v2018 = vunpack.c.l.b16 %v1964
      %v2019 = vunpack.c.h.b16 %v1964
      %v2020 = vunpack.c.l.b16 %v1965
      %v2021 = vunpack.c.h.b16 %v1965
      %v2022 = vunpack.c.l.b16 %v1966
      %v2023 = vunpack.c.h.b16 %v1966
      %v2024 = vunpack.c.l.b16 %v1967
      %v2025 = vunpack.c.h.b16 %v1967
      %v2026 = vunpack.c.l.b16 %v1968
      %v2027 = vunpack.c.h.b16 %v1968
      %v2028 = vunpack.c.l.b16 %v1969
      %v2029 = vunpack.c.h.b16 %v1969
      %v2030 = vpack.c.b16 %v2000, %v1998
      %v2031 = vpack.c.b16 %v2001, %v1999
      %v2032 = vpack.c.b16 %v2004, %v2002
      %v2033 = vpack.c.b16 %v2005, %v2003
      %v2034 = vpack.c.b16 %v2008, %v2006
      %v2035 = vpack.c.b16 %v2009, %v2007
      %v2036 = vpack.c.b16 %v2012, %v2010
      %v2037 = vpack.c.b16 %v2013, %v2011
      %v2038 = vpack.c.b16 %v2016, %v2014
      %v2039 = vpack.c.b16 %v2017, %v2015
      %v2040 = vpack.c.b16 %v2020, %v2018
      %v2041 = vpack.c.b16 %v2021, %v2019
      %v2042 = vpack.c.b16 %v2024, %v2022
      %v2043 = vpack.c.b16 %v2025, %v2023
      %v2044 = vpack.c.b16 %v2028, %v2026
      %v2045 = vpack.c.b16 %v2029, %v2027
      %2062 = vmatprep.subr.bf16.mxu0 %v2045
      %2063 = vmatpush1.bf16.msra.mxu0 %v2044
      %2064 = vmatprep.subr.bf16.mxu0 %v2043
      %2065 = vmatpush1.bf16.msra.mxu0 %v2042
      %2066 = vmatprep.subr.bf16.mxu0 %v2041
      %2067 = vmatpush1.bf16.msra.mxu0 %v2040
      %2068 = vmatprep.subr.bf16.mxu0 %v2039
      %2069 = vmatpush1.bf16.msra.mxu0 %v2038
      %2070 = vmatprep.subr.bf16.mxu0 %v2037
      %2071 = vmatpush1.bf16.msra.mxu0 %v2036
      %2072 = vmatprep.subr.bf16.mxu0 %v2035
      %2073 = vmatpush1.bf16.msra.mxu0 %v2034
      %2074 = vmatprep.subr.bf16.mxu0 %v2033
      %2075 = vmatpush1.bf16.msra.mxu0 %v2032
      %2076 = vmatprep.subr.bf16.mxu0 %v2031
      %2077 = vmatpush1.bf16.msra.mxu0 %v2030
      %2078 = vmatprep.subr.bf16.mxu0 0
      %2079 = vmatpush2.bf16.msra.mxu0 0
      %2080 = vmatprep.subr.bf16.mxu0 0
      %2081 = vmatpush2.bf16.msra.mxu0 0
      %2082 = vmatprep.subr.bf16.mxu0 0
      %2083 = vmatpush2.bf16.msra.mxu0 0
      %2084 = vmatprep.subr.bf16.mxu0 0
      %2085 = vmatpush2.bf16.msra.mxu0 0
      %2086 = vmatprep.subr.bf16.mxu0 0
      %2087 = vmatpush2.bf16.msra.mxu0 0
      %2088 = vmatprep.subr.bf16.mxu0 0
      %2089 = vmatpush2.bf16.msra.mxu0 0
      %2090 = vmatprep.subr.bf16.mxu0 0
      %2091 = vmatpush2.bf16.msra.mxu0 0
      %2092 = vmatprep.subr.bf16.mxu0 0
      %2093 = vmatpush2.bf16.msra.mxu0 0
      %2094 = vmatprep.mubr.bf16.mxu0 0
      %2095 = vmatmul.mubr.bf16.gmra.mxu0 %v1953
      %v2096 = vpop.f32.mrf.mxu0
      %v2097 = vadd.f32 %v1975, %v2096
      %v2098 = vpop.f32.mrf.mxu0
      %v2099 = vadd.f32 %v1979, %v2098
      %v2100 = vpop.f32.mrf.mxu0
      %v2101 = vpop.f32.mrf.mxu0
      %2102 = vdwg.mxu0
      %v2103 = vmul.f32 %v2097, 0.5
      %v2104 = vmul.f32 %v2099, 0.5
      %v2105 = vmul.f32 %v2097, 0.044715
      %v2106 = vmul.f32 %v2099, 0.044715
      %v2107 = vmul.f32 %v2105, %v2097
      %v2108 = vmul.f32 %v2106, %v2099
      %v2109 = vmul.f32 %v2107, %v2097
      %v2110 = vmul.f32 %v2108, %v2099
      %v2111 = vadd.f32 %v2097, %v2109
      %v2112 = vadd.f32 %v2099, %v2110
      %v2113 = vmul.f32 %v2111, 0.7978846
      %v2114 = vmul.f32 %v2112, 0.7978846
      %v2115 = vtanh.pop %v2113
      %v2116 = vtanh.pop %v2114
      %v2117 = vadd.f32 %v2115, 1.0
      %v2118 = vadd.f32 %v2116, 1.0
      %v2119 = vmul.f32 %v2103, %v2117
      %v2120 = vmul.f32 %v2104, %v2118
      %v2121 = vpack.c.bf16 %v2119, %v2119
      %v2122 = vpack.c.bf16 %v2120, %v2120
      %v2123 = vld [vmem:[%s11] sm:$0xf]
      %v2124 = vld [vmem:[%s11 + $0x4] sm:$0xf]
      %v2125 = vld [vmem:[%s11 + $0x8] sm:$0xf]
      %v2126 = vld [vmem:[%s11 + $0xc] sm:$0xf]
      %v2127 = vld [vmem:[%s11 + $0x10] sm:$0xf]
      %v2128 = vld [vmem:[%s11 + $0x14] sm:$0xf]
      %v2129 = vld [vmem:[%s11 + $0x18] sm:$0xf]
      %v2130 = vld [vmem:[%s11 + $0x1c] sm:$0xf]
      %v2131 = vld [vmem:[%s11 + $0x20] sm:$0xf]
      %v2132 = vld [vmem:[%s11 + $0x24] sm:$0xf]
      %v2133 = vld [vmem:[%s11 + $0x28] sm:$0xf]
      %v2134 = vld [vmem:[%s11 + $0x2c] sm:$0xf]
      %v2135 = vld [vmem:[%s11 + $0x30] sm:$0xf]
      %v2136 = vld [vmem:[%s11 + $0x34] sm:$0xf]
      %v2137 = vld [vmem:[%s11 + $0x38] sm:$0xf]
      %v2138 = vld [vmem:[%s11 + $0x3c] sm:$0xf]
      %v2139 = vld [vmem:[%s11 + $0x40] sm:$0xf]
      %v2140 = vld [vmem:[%s11 + $0x44] sm:$0xf]
      %v2141 = vld [vmem:[%s11 + $0x48] sm:$0xf]
      %v2142 = vld [vmem:[%s11 + $0x4c] sm:$0xf]
      %v2143 = vld [vmem:[%s11 + $0x50] sm:$0xf]
      %v2144 = vld [vmem:[%s11 + $0x54] sm:$0xf]
      %v2145 = vld [vmem:[%s11 + $0x58] sm:$0xf]
      %v2146 = vld [vmem:[%s11 + $0x5c] sm:$0xf]
      %v2147 = vld [vmem:[%s11 + $0x60] sm:$0xf]
      %v2148 = vld [vmem:[%s11 + $0x64] sm:$0xf]
      %v2149 = vld [vmem:[%s11 + $0x68] sm:$0xf]
      %v2150 = vld [vmem:[%s11 + $0x6c] sm:$0xf]
      %v2151 = vld [vmem:[%s11 + $0x70] sm:$0xf]
      %v2152 = vld [vmem:[%s11 + $0x74] sm:$0xf]
      %v2153 = vld [vmem:[%s11 + $0x78] sm:$0xf]
      %v2154 = vld [vmem:[%s11 + $0x7c] sm:$0xf]
      %v2155 = vld [vmem:[%s12] sm:$0x1]
      %v2157 = vlaneseq
      %v2158 = vshrl.u32 %v2157, 7
      %v2159 = vsub.s32 0, %v2158
      %v2160 = vrot.slane %v2155, %v2159
      %v2194 = vunpack.c.l.b16 %v2123
      %v2195 = vunpack.c.l.b16 %v2124
      %v2196 = vunpack.c.l.b16 %v2125
      %v2197 = vunpack.c.l.b16 %v2126
      %v2198 = vunpack.c.l.b16 %v2127
      %v2199 = vunpack.c.l.b16 %v2128
      %v2200 = vunpack.c.l.b16 %v2129
      %v2201 = vunpack.c.l.b16 %v2130
      %v2202 = vunpack.c.l.b16 %v2131
      %v2203 = vunpack.c.l.b16 %v2132
      %v2204 = vunpack.c.l.b16 %v2133
      %v2205 = vunpack.c.l.b16 %v2134
      %v2206 = vunpack.c.l.b16 %v2135
      %v2207 = vunpack.c.l.b16 %v2136
      %v2208 = vunpack.c.l.b16 %v2137
      %v2209 = vunpack.c.l.b16 %v2138
      %v2210 = vunpack.c.l.b16 %v2139
      %v2211 = vunpack.c.l.b16 %v2140
      %v2212 = vunpack.c.l.b16 %v2141
      %v2213 = vunpack.c.l.b16 %v2142
      %v2214 = vunpack.c.l.b16 %v2143
      %v2215 = vunpack.c.l.b16 %v2144
      %v2216 = vunpack.c.l.b16 %v2145
      %v2217 = vunpack.c.l.b16 %v2146
      %v2218 = vunpack.c.l.b16 %v2147
      %v2219 = vunpack.c.l.b16 %v2148
      %v2220 = vunpack.c.l.b16 %v2149
      %v2221 = vunpack.c.l.b16 %v2150
      %v2222 = vunpack.c.l.b16 %v2151
      %v2223 = vunpack.c.l.b16 %v2152
      %v2224 = vunpack.c.l.b16 %v2153
      %v2225 = vunpack.c.l.b16 %v2154
      %v2226 = vpack.c.b16 %v2195, %v2194
      %v2227 = vpack.c.b16 %v2197, %v2196
      %v2228 = vpack.c.b16 %v2199, %v2198
      %v2229 = vpack.c.b16 %v2201, %v2200
      %v2230 = vpack.c.b16 %v2203, %v2202
      %v2231 = vpack.c.b16 %v2205, %v2204
      %v2232 = vpack.c.b16 %v2207, %v2206
      %v2233 = vpack.c.b16 %v2209, %v2208
      %v2234 = vpack.c.b16 %v2211, %v2210
      %v2235 = vpack.c.b16 %v2213, %v2212
      %v2236 = vpack.c.b16 %v2215, %v2214
      %v2237 = vpack.c.b16 %v2217, %v2216
      %v2238 = vpack.c.b16 %v2219, %v2218
      %v2239 = vpack.c.b16 %v2221, %v2220
      %v2240 = vpack.c.b16 %v2223, %v2222
      %v2241 = vpack.c.b16 %v2225, %v2224
      %2258 = vmatprep.subr.bf16.mxu0 0
      %2259 = vmatpush1.bf16.msra.mxu0 %v2233
      %2260 = vmatprep.subr.bf16.mxu0 0
      %2261 = vmatpush1.bf16.msra.mxu0 %v2232
      %2262 = vmatprep.subr.bf16.mxu0 0
      %2263 = vmatpush1.bf16.msra.mxu0 %v2231
      %2264 = vmatprep.subr.bf16.mxu0 0
      %2265 = vmatpush1.bf16.msra.mxu0 %v2230
      %2266 = vmatprep.subr.bf16.mxu0 0
      %2267 = vmatpush1.bf16.msra.mxu0 %v2229
      %2268 = vmatprep.subr.bf16.mxu0 0
      %2269 = vmatpush1.bf16.msra.mxu0 %v2228
      %2270 = vmatprep.subr.bf16.mxu0 0
      %2271 = vmatpush1.bf16.msra.mxu0 %v2227
      %2272 = vmatprep.subr.bf16.mxu0 0
      %2273 = vmatpush1.bf16.msra.mxu0 %v2226
      %2274 = vmatprep.subr.bf16.mxu0 0
      %2275 = vmatpush2.bf16.msra.mxu0 %v2241
      %2276 = vmatprep.subr.bf16.mxu0 0
      %2277 = vmatpush2.bf16.msra.mxu0 %v2240
      %2278 = vmatprep.subr.bf16.mxu0 0
      %2279 = vmatpush2.bf16.msra.mxu0 %v2239
      %2280 = vmatprep.subr.bf16.mxu0 0
      %2281 = vmatpush2.bf16.msra.mxu0 %v2238
      %2282 = vmatprep.subr.bf16.mxu0 0
      %2283 = vmatpush2.bf16.msra.mxu0 %v2237
      %2284 = vmatprep.subr.bf16.mxu0 0
      %2285 = vmatpush2.bf16.msra.mxu0 %v2236
      %2286 = vmatprep.subr.bf16.mxu0 0
      %2287 = vmatpush2.bf16.msra.mxu0 %v2235
      %2288 = vmatprep.subr.bf16.mxu0 0
      %2289 = vmatpush2.bf16.msra.mxu0 %v2234
      %2290 = vmatprep.mubr.bf16.mxu0 %v2122
      %2291 = vmatmul.mubr.bf16.gmra.mxu0 %v2121
      %v2292 = vpop.f32.mrf.mxu0
      %v2293 = vadd.f32 %v2160, %v2292
      %v2294 = vpop.f32.mrf.mxu0
      %v2295 = vpop.f32.mrf.mxu0
      %v2296 = vpop.f32.mrf.mxu0
      %2297 = vdwg.mxu0
      %v2298 = vadd.f32 %v1925, %v2293
      %v2299 = vlaneseq
      %v2300 = vshrl.u32 %v2299, 7
      %vm2301 = vcmp.lt.s32.totalorder %v2300, 5
      %v2302 = vsel %vm2301, 1, 0
      %vm2303 = vcmp.eq.s32.totalorder %v2302, 1
      %v2304 = vsel %vm2303, %v2298, 0.0
      %2305 = vst [vmem:[%s435] sm:$0xff] %v2304
      %p2306 = scmp.lt.s32.totalorder %s24, 1
      %s2307 = scalar_select %p2306, %s24, 1
      %s2308 = smul.addr %s2307, 8
      %s2309 = scalar_lea.vmem %s13, %s2308
      // Predicated region
      $region73: #{vit_forward.5} parent=71 // pred_check
        %p2310 = pneg %p320
      $region74: #{vit_forward.5} parent=71 // pred_check_branch
        %2312 = sbr.rel (%p2310) target = $region76
      $region75: #{vit_forward.5} parent=71 // pred_region
        _
      $region76: #{vit_forward.5} parent=71 // pred_fallthru
        _
    $region72: #{vit_forward.5} parent=5 // pred_fallthru
      _
    %p2313 = scmp.le.s32.totalorder 2, %s19
    // Predicated region
    $region77: #{vit_forward.5} parent=5 // pred_check
      %p2314 = pneg %p2313
    $region78: #{vit_forward.5} parent=5 // pred_check_branch
      %2316 = sbr.rel (%p2314) target = $region80
    $region79: #{vit_forward.5} parent=5 // pred_region
      %s2317 = ssub.s32 %s19, 2
      // Predicated region
      $region81: #{vit_forward.5} parent=79 // pred_check
        %p2318 = pneg %p326
      $region82: #{vit_forward.5} parent=79 // pred_check_branch
        %2320 = sbr.rel (%p2318) target = $region84
      $region83: #{vit_forward.5} parent=79 // pred_region
        %p2321 = scmp.lt.s32.totalorder %s25, 1
        %s2322 = scalar_select %p2321, %s25, 1
        %s2323 = smul.addr %s2322, 8
        %s2324 = scalar_lea.vmem %s13, %s2323
      $region84: #{vit_forward.5} parent=79 // pred_fallthru
        _
    $region80: #{vit_forward.5} parent=5 // pred_fallthru
      _
  $region6: #{vit_forward.5} parent=0 // loop_footer
    %s23 = sadd.s32 1, %s19
  $region7: #{vit_forward.5} parent=0 // loop_footer_branch
    %18 = sbr.rel target = $region3
  $region8: #{vit_forward.5} parent=0 // loop_exit
    _

</llo_original>
